<compile_context>
chip_gen: v7x
topology: tpu7x:2x2x1
jax: 0.10.0
libtpu: 0.0.40
codegen_flags: <defaults>
</compile_context>

<pallas_src>
import functools

import jax
import jax.numpy as jnp
from jax import lax
from jax.experimental import pallas as pl
from jax.experimental.pallas import tpu as pltpu


def se_bottleneck_kernel(x_ref, w1_ref, s1_ref, b1_ref,
                         w2_ref, s2_ref, b2_ref,
                         w3_ref, s3_ref, b3_ref,
                         fw1_ref, fb1_ref, fw2_ref, fb2_ref,
                         o_ref, pad_ref, *, H, W, pad_top):
    BB, HW, Cin = x_ref.shape
    assert HW == H * W
    P = w1_ref.shape[1]
    C4 = w3_ref.shape[1]
    M = BB * HW

    x3 = x_ref[...]                                   # (BB, HW, Cin)  f32
    x2 = x3.reshape(M, Cin)

    # ---- conv1 (1x1, no bias) + bn1 + relu ---------------------------------
    h1 = jnp.dot(x2.astype(jnp.bfloat16), w1_ref[...],
                 preferred_element_type=jnp.float32)
    h1 = jnp.maximum(h1 * s1_ref[...] + b1_ref[...], 0.0)        # (M, P) f32

    # ---- conv2 (3x3, stride=1, pad=1) + bn2 + relu -------------------------
    # Per-image zero-padded scratch, flat over (row, col):
    #   rows [pad_top, pad_top+HW)              : h1 of this image, row-major
    #   rows [0, pad_top) & [pad_top+HW, total) : zero halo (>= W+1 rows each)
    # pad_top is a multiple of 8, so the interior store and the dx=0 tap loads
    # are sublane-aligned.  Only the halo rows are zeroed (interior is fully
    # overwritten every step); zeroing is unconditional because it is only a
    # few KB and stays correct if the batch is later split across grid
    # steps / TensorCores (a program_id==0 gate would not).
    n_bot = pad_ref.shape[1] - pad_top - HW
    pad_ref[:, :pad_top, :] = jnp.zeros((BB, pad_top, P), pad_ref.dtype)
    pad_ref[:, pad_top + HW:, :] = jnp.zeros((BB, n_bot, P), pad_ref.dtype)
    pad_ref[:, pad_top:pad_top + HW, :] = h1.reshape(BB, HW, P)

    # Two distinct horizontal-wrap masks (dx = -1 / dx = +1), built once.
    col_idx = lax.broadcasted_iota(jnp.int32, (1, HW, 1), 1) % W
    mask_l = col_idx >= 1          # kill wrap-around of dx = -1 at column 0
    mask_r = col_idx < (W - 1)     # kill wrap-around of dx = +1 at column W-1

    # im2col: 9 shifted taps -> one (M, 9P) operand -> a single K=9P matmul.
    taps = []
    for ky in range(3):
        for kx in range(3):
            dy, dx = ky - 1, kx - 1
            start = pad_top + dy * W + dx            # static python int
            s = pad_ref[:, start:start + HW, :]      # (BB, HW, P) f32
            if dx == -1:
                s = jnp.where(mask_l, s, 0.0)
            elif dx == 1:
                s = jnp.where(mask_r, s, 0.0)
            taps.append(s)
    col = jnp.concatenate(taps, axis=-1).reshape(M, 9 * P)       # (M, 9P) f32
    h2 = jnp.dot(col.astype(jnp.bfloat16), w2_ref[...],
                 preferred_element_type=jnp.float32)
    h2 = jnp.maximum(h2 * s2_ref[...] + b2_ref[...], 0.0)        # (M, P) f32

    # ---- conv3 (1x1) + bn3 --------------------------------------------------
    h3 = jnp.dot(h2.astype(jnp.bfloat16), w3_ref[...],
                 preferred_element_type=jnp.float32)
    h3 = h3 * s3_ref[...] + b3_ref[...]                          # (M, C4) f32

    # ---- SE: per-image global avg pool -> fc -> relu -> fc -> sigmoid ------
    h3i = h3.reshape(BB, HW, C4)
    y = jnp.sum(h3i, axis=1) * (1.0 / HW)                        # (BB, C4)
    y = jnp.maximum(
        jnp.dot(y.astype(jnp.bfloat16), fw1_ref[...],
                preferred_element_type=jnp.float32) + fb1_ref[...], 0.0)
    y = jax.nn.sigmoid(
        jnp.dot(y.astype(jnp.bfloat16), fw2_ref[...],
                preferred_element_type=jnp.float32) + fb2_ref[...])

    # ---- channel re-scale + residual add + relu (downsample is None) -------
    out = jnp.maximum(h3i * y[:, None, :] + x3, 0.0)
    o_ref[...] = out.astype(o_ref.dtype)


def se_bottleneck(x_nchw, kp, *, planes, batch_block=None):
    """x_nchw: (B, 4*planes, H, W) f32.  kp: kernel-layout params.  NCHW out."""
    B, Cin, H, W = x_nchw.shape
    P = planes
    C4 = 4 * P
    assert Cin == C4, "downsample=None requires inplanes == 4*planes"
    HW = H * W
    BB = B if batch_block is None else batch_block
    assert B % BB == 0
    nb = B // BB

    # Sublane-aligned halo: >= W+1 zero rows above/below, rounded up to 8.
    pad_top = -(-(W + 1) // 8) * 8
    total_rows = pad_top + HW + pad_top

    x = jnp.transpose(x_nchw, (0, 2, 3, 1)).reshape(B, HW, Cin)

    kernel = functools.partial(se_bottleneck_kernel, H=H, W=W, pad_top=pad_top)

    def full(arr):
        shape = arr.shape
        n = len(shape)
        return pl.BlockSpec(shape, lambda b, _n=n: (0,) * _n)

    # VMEM budget per grid step: x/out blocks (double-buffered) + pad scratch +
    # intermediates.  For the demo sizes this is well under 1 MiB; for large
    # H*W split the batch via `batch_block` to stay inside v7x's 64 MiB VMEM.
    out = pl.pallas_call(
        kernel,
        out_shape=jax.ShapeDtypeStruct((B, HW, C4), jnp.float32),
        grid_spec=pltpu.PrefetchScalarGridSpec(
            num_scalar_prefetch=0,
            grid=(nb,),
            in_specs=[
                pl.BlockSpec((BB, HW, Cin), lambda b: (b, 0, 0)),    # x
                full(kp["w1m"]), full(kp["s1"]), full(kp["b1"]),     # conv1/bn1
                full(kp["w2m"]), full(kp["s2"]), full(kp["b2"]),     # conv2/bn2
                full(kp["w3m"]), full(kp["s3"]), full(kp["b3"]),     # conv3/bn3
                full(kp["fw1"]), full(kp["fb1"]),                    # se fc1
                full(kp["fw2"]), full(kp["fb2"]),                    # se fc2
            ],
            out_specs=pl.BlockSpec((BB, HW, C4), lambda b: (b, 0, 0)),
            scratch_shapes=[pltpu.VMEM((BB, total_rows, P), jnp.float32)],
        ),
        compiler_params=pltpu.CompilerParams(
            dimension_semantics=("parallel",)),
    )(x, kp["w1m"], kp["s1"], kp["b1"],
      kp["w2m"], kp["s2"], kp["b2"],
      kp["w3m"], kp["s3"], kp["b3"],
      kp["fw1"], kp["fb1"], kp["fw2"], kp["fb2"])

    return jnp.transpose(out.reshape(B, H, W, C4), (0, 3, 1, 2))


# ----------------------------- parameter setup --------------------------------
def init_params(key, inplanes, planes, reduction=16, eps=1e-5):
    """Synthetic SEBottleneck params.

    Returns (raw, kp): `raw` holds PyTorch-shaped f32 params for the pure-JAX
    reference; `kp` holds the kernel layouts (conv/fc weights in bf16, BN
    folded to per-channel scale/bias).  Conv/fc weights are rounded to the bf16
    grid up-front so kernel and reference use numerically identical weights.
    """
    P = planes
    C4 = 4 * P
    R = C4 // reduction
    ks = jax.random.split(key, 10)

    def bf16_round(a):
        return a.astype(jnp.bfloat16).astype(jnp.float32)

    w1 = bf16_round(jax.random.normal(ks[0], (P, inplanes, 1, 1), jnp.float32) * 0.1)
    w2 = bf16_round(jax.random.normal(ks[1], (P, P, 3, 3), jnp.float32) * 0.1)
    w3 = bf16_round(jax.random.normal(ks[2], (C4, P, 1, 1), jnp.float32) * 0.1)

    def bn(k, c):
        k1, k2, k3, k4 = jax.random.split(k, 4)
        gamma = jax.random.uniform(k1, (c,), jnp.float32, 0.5, 1.5)
        beta = jax.random.normal(k2, (c,), jnp.float32) * 0.1
        mean = jax.random.normal(k3, (c,), jnp.float32) * 0.1
        var = jax.random.uniform(k4, (c,), jnp.float32, 0.5, 1.5)
        return gamma, beta, mean, var

    bn1, bn2, bn3 = bn(ks[3], P), bn(ks[4], P), bn(ks[5], C4)
    fc1_w = bf16_round(jax.random.normal(ks[6], (R, C4), jnp.float32) * 0.1)
    fc1_b = jax.random.normal(ks[7], (R,), jnp.float32) * 0.1
    fc2_w = bf16_round(jax.random.normal(ks[8], (C4, R), jnp.float32) * 0.1)
    fc2_b = jax.random.normal(ks[9], (C4,), jnp.float32) * 0.1

    raw = dict(w1=w1, w2=w2, w3=w3, bn1=bn1, bn2=bn2, bn3=bn3,
               fc1_w=fc1_w, fc1_b=fc1_b, fc2_w=fc2_w, fc2_b=fc2_b)

    def fold(bnp):
        g, b, m, v = bnp
        s = g / jnp.sqrt(v + eps)
        return s, b - m * s

    s1, b1 = fold(bn1)
    s2, b2 = fold(bn2)
    s3, b3 = fold(bn3)

    # im2col weight layout: tap (ky, kx) -> rows [t*P, (t+1)*P), t = ky*3 + kx.
    w2m = jnp.concatenate(
        [w2[:, :, ky, kx].T for ky in range(3) for kx in range(3)], axis=0)

    kp = dict(
        w1m=w1.reshape(P, inplanes).T.astype(jnp.bfloat16),      # (Cin, P)
        w2m=w2m.astype(jnp.bfloat16),                            # (9P, P)
        w3m=w3.reshape(C4, P).T.astype(jnp.bfloat16),            # (P, 4P)
        s1=s1[None, :], b1=b1[None, :],
        s2=s2[None, :], b2=b2[None, :],
        s3=s3[None, :], b3=b3[None, :],
        fw1=fc1_w.T.astype(jnp.bfloat16), fb1=fc1_b[None, :],    # (4P,R),(1,R)
        fw2=fc2_w.T.astype(jnp.bfloat16), fb2=fc2_b[None, :],    # (R,4P),(1,4P)
    )
    return raw, kp


# ------------------------ pure-JAX (NCHW) reference ---------------------------
def ref_forward(x, raw, eps=1e-5):
    def bn(o, p):
        g, b, m, v = p
        s = (g / jnp.sqrt(v + eps))[None, :, None, None]
        return (o - m[None, :, None, None]) * s + b[None, :, None, None]

    dn = ("NCHW", "OIHW", "NCHW")
    out = lax.conv_general_dilated(x, raw["w1"], (1, 1), "VALID",
                                   dimension_numbers=dn)
    out = jax.nn.relu(bn(out, raw["bn1"]))
    out = lax.conv_general_dilated(out, raw["w2"], (1, 1), ((1, 1), (1, 1)),
                                   dimension_numbers=dn)
    out = jax.nn.relu(bn(out, raw["bn2"]))
    out = lax.conv_general_dilated(out, raw["w3"], (1, 1), "VALID",
                                   dimension_numbers=dn)
    out = bn(out, raw["bn3"])
    y = out.mean(axis=(2, 3))
    y = jax.nn.relu(y @ raw["fc1_w"].T + raw["fc1_b"])
    y = jax.nn.sigmoid(y @ raw["fc2_w"].T + raw["fc2_b"])
    out = out * y[:, :, None, None]
    return jax.nn.relu(out + x)


if __name__ == "__main__":
    # Lane-dense demo sizing: planes=32 -> C4 = 128 channels (full 128-lane vreg).
    B, planes, reduction = 2, 32, 16
    inplanes = planes * 4     # downsample=None => residual needs Cin == 4*planes
    H = W = 8

    key = jax.random.PRNGKey(0)
    k_x, k_p = jax.random.split(key)
    x = jax.random.normal(k_x, (B, inplanes, H, W), jnp.float32)

    raw, kp = init_params(k_p, inplanes, planes, reduction)

    out = se_bottleneck(x, kp, planes=planes)
    out = jax.block_until_ready(out)

    ref = jax.block_until_ready(ref_forward(x, raw))
    assert out.shape == (B, inplanes, H, W)
    max_err = float(jnp.max(jnp.abs(out - ref)))
    assert jnp.allclose(out, ref, atol=5e-2, rtol=5e-2), \
        f"max abs err {max_err}"

    print("KERNEL_OK")
</pallas_src>

<mosaic_0001>
module attributes {stable_mosaic.version = 11 : i64} {
  func.func @se_bottleneck_kernel(%arg0: i32, %arg1: memref<2x64x128xf32, #tpu.memory_space<vmem>>, %arg2: memref<128x32xbf16, #tpu.memory_space<vmem>>, %arg3: memref<1x32xf32, #tpu.memory_space<vmem>>, %arg4: memref<1x32xf32, #tpu.memory_space<vmem>>, %arg5: memref<288x32xbf16, #tpu.memory_space<vmem>>, %arg6: memref<1x32xf32, #tpu.memory_space<vmem>>, %arg7: memref<1x32xf32, #tpu.memory_space<vmem>>, %arg8: memref<32x128xbf16, #tpu.memory_space<vmem>>, %arg9: memref<1x128xf32, #tpu.memory_space<vmem>>, %arg10: memref<1x128xf32, #tpu.memory_space<vmem>>, %arg11: memref<128x8xbf16, #tpu.memory_space<vmem>>, %arg12: memref<1x8xf32, #tpu.memory_space<vmem>>, %arg13: memref<8x128xbf16, #tpu.memory_space<vmem>>, %arg14: memref<1x128xf32, #tpu.memory_space<vmem>>, %arg15: memref<2x64x128xf32, #tpu.memory_space<vmem>>, %arg16: memref<2x96x32xf32, #tpu.memory_space<vmem>>) attributes {dimension_semantics = [#tpu.dimension_semantics<parallel>], iteration_bounds = array<i64: 1>, scalar_prefetch = 0 : i64, scratch_operands = 1 : i64, tpu.core_type = #tpu.core_type<tc>, window_params = [{transform_indices = @transform_0, window_bounds = array<i64: 2, 64, 128>}, {pipeline_mode = #tpu.pipeline_mode<synchronous>, transform_indices = @transform_1, window_bounds = array<i64: 128, 32>}, {pipeline_mode = #tpu.pipeline_mode<synchronous>, transform_indices = @transform_2, window_bounds = array<i64: 1, 32>}, {pipeline_mode = #tpu.pipeline_mode<synchronous>, transform_indices = @transform_3, window_bounds = array<i64: 1, 32>}, {pipeline_mode = #tpu.pipeline_mode<synchronous>, transform_indices = @transform_4, window_bounds = array<i64: 288, 32>}, {pipeline_mode = #tpu.pipeline_mode<synchronous>, transform_indices = @transform_5, window_bounds = array<i64: 1, 32>}, {pipeline_mode = #tpu.pipeline_mode<synchronous>, transform_indices = @transform_6, window_bounds = array<i64: 1, 32>}, {pipeline_mode = #tpu.pipeline_mode<synchronous>, transform_indices = @transform_7, window_bounds = array<i64: 32, 128>}, {pipeline_mode = #tpu.pipeline_mode<synchronous>, transform_indices = @transform_8, window_bounds = array<i64: 1, 128>}, {pipeline_mode = #tpu.pipeline_mode<synchronous>, transform_indices = @transform_9, window_bounds = array<i64: 1, 128>}, {pipeline_mode = #tpu.pipeline_mode<synchronous>, transform_indices = @transform_10, window_bounds = array<i64: 128, 8>}, {pipeline_mode = #tpu.pipeline_mode<synchronous>, transform_indices = @transform_11, window_bounds = array<i64: 1, 8>}, {pipeline_mode = #tpu.pipeline_mode<synchronous>, transform_indices = @transform_12, window_bounds = array<i64: 8, 128>}, {pipeline_mode = #tpu.pipeline_mode<synchronous>, transform_indices = @transform_13, window_bounds = array<i64: 1, 128>}, {transform_indices = @transform_14, window_bounds = array<i64: 2, 64, 128>}]} {
    %c0 = arith.constant 0 : index
    %c0_0 = arith.constant 0 : index
    %c0_1 = arith.constant 0 : index
    %0 = vector.load %arg1[%c0, %c0_0, %c0_1] : memref<2x64x128xf32, #tpu.memory_space<vmem>>, vector<2x64x128xf32>
    %1 = vector.shape_cast %0 : vector<2x64x128xf32> to vector<128x128xf32>
    %2 = arith.truncf %1 : vector<128x128xf32> to vector<128x128xbf16>
    %c0_2 = arith.constant 0 : index
    %c0_3 = arith.constant 0 : index
    %3 = vector.load %arg2[%c0_2, %c0_3] : memref<128x32xbf16, #tpu.memory_space<vmem>>, vector<128x32xbf16>
    %cst = arith.constant dense<0.000000e+00> : vector<128x32xf32>
    %4 = tpu.matmul %2, %3, %cst {dimension_numbers = #tpu.dot_dimension_numbers<[1], [0], [0], [1], [0, 0, 1, 1], [], []>} : vector<128x128xbf16>, vector<128x32xbf16>, vector<128x32xf32> -> vector<128x32xf32>
    %c0_4 = arith.constant 0 : index
    %c0_5 = arith.constant 0 : index
    %5 = vector.load %arg3[%c0_4, %c0_5] : memref<1x32xf32, #tpu.memory_space<vmem>>, vector<1x32xf32>
    %6 = vector.broadcast %5 : vector<1x32xf32> to vector<128x32xf32>
    %7 = arith.mulf %4, %6 : vector<128x32xf32>
    %c0_6 = arith.constant 0 : index
    %c0_7 = arith.constant 0 : index
    %8 = vector.load %arg4[%c0_6, %c0_7] : memref<1x32xf32, #tpu.memory_space<vmem>>, vector<1x32xf32>
    %9 = vector.broadcast %8 : vector<1x32xf32> to vector<128x32xf32>
    %10 = arith.addf %7, %9 : vector<128x32xf32>
    %cst_8 = arith.constant 0.000000e+00 : f32
    %11 = vector.broadcast %cst_8 : f32 to vector<128x32xf32>
    %12 = arith.maximumf %10, %11 : vector<128x32xf32>
    %cst_9 = arith.constant 0.000000e+00 : f32
    %13 = vector.broadcast %cst_9 : f32 to vector<2x16x32xf32>
    %c0_10 = arith.constant 0 : index
    %c0_11 = arith.constant 0 : index
    %c0_12 = arith.constant 0 : index
    %14 = vector.load %arg16[%c0_10, %c0_11, %c0_12] : memref<2x96x32xf32, #tpu.memory_space<vmem>>, vector<2x16x32xf32>
    tpu.vector_store %arg16[%c0_10, %c0_11, %c0_12], %13 {strides = array<i32>} : memref<2x96x32xf32, #tpu.memory_space<vmem>>, vector<2x16x32xf32>,
    %cst_13 = arith.constant 0.000000e+00 : f32
    %15 = vector.broadcast %cst_13 : f32 to vector<2x16x32xf32>
    %c0_14 = arith.constant 0 : index
    %c80 = arith.constant 80 : index
    %c0_15 = arith.constant 0 : index
    %16 = vector.load %arg16[%c0_14, %c80, %c0_15] : memref<2x96x32xf32, #tpu.memory_space<vmem>>, vector<2x16x32xf32>
    tpu.vector_store %arg16[%c0_14, %c80, %c0_15], %15 {strides = array<i32>} : memref<2x96x32xf32, #tpu.memory_space<vmem>>, vector<2x16x32xf32>,
    %17 = vector.shape_cast %12 : vector<128x32xf32> to vector<2x64x32xf32>
    %c0_16 = arith.constant 0 : index
    %c16 = arith.constant 16 : index
    %c0_17 = arith.constant 0 : index
    %18 = vector.load %arg16[%c0_16, %c16, %c0_17] : memref<2x96x32xf32, #tpu.memory_space<vmem>>, vector<2x64x32xf32>
    tpu.vector_store %arg16[%c0_16, %c16, %c0_17], %17 {strides = array<i32>} : memref<2x96x32xf32, #tpu.memory_space<vmem>>, vector<2x64x32xf32>,
    %19 = tpu.iota {dimensions = array<i32: 1>} : vector<1x64x1xi32>
    %c8_i32 = arith.constant 8 : i32
    %c0_i32 = arith.constant 0 : i32
    %20 = arith.cmpi eq, %c8_i32, %c0_i32 : i32
    %c1_i32 = arith.constant 1 : i32
    %21 = arith.select %20, %c1_i32, %c8_i32 : i32
    %22 = vector.broadcast %21 : i32 to vector<1x64x1xi32>
    %23 = arith.remsi %19, %22 : vector<1x64x1xi32>
    %c0_i32_18 = arith.constant 0 : i32
    %24 = vector.broadcast %c0_i32_18 : i32 to vector<1x64x1xi32>
    %25 = arith.cmpi ne, %23, %24 : vector<1x64x1xi32>
    %c0_i32_19 = arith.constant 0 : i32
    %26 = vector.broadcast %c0_i32_19 : i32 to vector<1x64x1xi32>
    %27 = arith.cmpi slt, %23, %26 : vector<1x64x1xi32>
    %c0_i32_20 = arith.constant 0 : i32
    %28 = arith.cmpi slt, %21, %c0_i32_20 : i32
    %29 = vector.broadcast %28 : i1 to vector<1x64x1xi1>
    %30 = vector.broadcast %29 : vector<1x64x1xi1> to vector<1x64x1xi1>
    %31 = arith.xori %27, %30 : vector<1x64x1xi1>
    %32 = arith.andi %31, %25 : vector<1x64x1xi1>
    %33 = vector.broadcast %21 : i32 to vector<1x64x1xi32>
    %34 = arith.addi %23, %33 : vector<1x64x1xi32>
    %35 = arith.select %32, %34, %23 : vector<1x64x1xi1>, vector<1x64x1xi32>
    %c1_i32_21 = arith.constant 1 : i32
    %36 = vector.broadcast %c1_i32_21 : i32 to vector<1x64x1xi32>
    %37 = arith.cmpi sge, %35, %36 : vector<1x64x1xi32>
    %c7_i32 = arith.constant 7 : i32
    %38 = vector.broadcast %c7_i32 : i32 to vector<1x64x1xi32>
    %39 = arith.cmpi slt, %35, %38 : vector<1x64x1xi32>
    %c0_22 = arith.constant 0 : index
    %c7 = arith.constant 7 : index
    %c0_23 = arith.constant 0 : index
    %40 = vector.load %arg16[%c0_22, %c7, %c0_23] : memref<2x96x32xf32, #tpu.memory_space<vmem>>, vector<2x64x32xf32>
    %cst_24 = arith.constant 0.000000e+00 : f32
    %41 = vector.shape_cast %37 : vector<1x64x1xi1> to vector<1x64x1xi1>
    %42 = vector.broadcast %41 : vector<1x64x1xi1> to vector<2x64x32xi1>
    %43 = vector.broadcast %cst_24 : f32 to vector<2x64x32xf32>
    %44 = arith.select %42, %40, %43 : vector<2x64x32xi1>, vector<2x64x32xf32>
    %c0_25 = arith.constant 0 : index
    %c8 = arith.constant 8 : index
    %c0_26 = arith.constant 0 : index
    %45 = vector.load %arg16[%c0_25, %c8, %c0_26] : memref<2x96x32xf32, #tpu.memory_space<vmem>>, vector<2x64x32xf32>
    %c0_27 = arith.constant 0 : index
    %c9 = arith.constant 9 : index
    %c0_28 = arith.constant 0 : index
    %46 = vector.load %arg16[%c0_27, %c9, %c0_28] : memref<2x96x32xf32, #tpu.memory_space<vmem>>, vector<2x64x32xf32>
    %cst_29 = arith.constant 0.000000e+00 : f32
    %47 = vector.shape_cast %39 : vector<1x64x1xi1> to vector<1x64x1xi1>
    %48 = vector.broadcast %47 : vector<1x64x1xi1> to vector<2x64x32xi1>
    %49 = vector.broadcast %cst_29 : f32 to vector<2x64x32xf32>
    %50 = arith.select %48, %46, %49 : vector<2x64x32xi1>, vector<2x64x32xf32>
    %c0_30 = arith.constant 0 : index
    %c15 = arith.constant 15 : index
    %c0_31 = arith.constant 0 : index
    %51 = vector.load %arg16[%c0_30, %c15, %c0_31] : memref<2x96x32xf32, #tpu.memory_space<vmem>>, vector<2x64x32xf32>
    %cst_32 = arith.constant 0.000000e+00 : f32
    %52 = vector.shape_cast %37 : vector<1x64x1xi1> to vector<1x64x1xi1>
    %53 = vector.broadcast %52 : vector<1x64x1xi1> to vector<2x64x32xi1>
    %54 = vector.broadcast %cst_32 : f32 to vector<2x64x32xf32>
    %55 = arith.select %53, %51, %54 : vector<2x64x32xi1>, vector<2x64x32xf32>
    %c0_33 = arith.constant 0 : index
    %c16_34 = arith.constant 16 : index
    %c0_35 = arith.constant 0 : index
    %56 = vector.load %arg16[%c0_33, %c16_34, %c0_35] : memref<2x96x32xf32, #tpu.memory_space<vmem>>, vector<2x64x32xf32>
    %c0_36 = arith.constant 0 : index
    %c17 = arith.constant 17 : index
    %c0_37 = arith.constant 0 : index
    %57 = vector.load %arg16[%c0_36, %c17, %c0_37] : memref<2x96x32xf32, #tpu.memory_space<vmem>>, vector<2x64x32xf32>
    %cst_38 = arith.constant 0.000000e+00 : f32
    %58 = vector.shape_cast %39 : vector<1x64x1xi1> to vector<1x64x1xi1>
    %59 = vector.broadcast %58 : vector<1x64x1xi1> to vector<2x64x32xi1>
    %60 = vector.broadcast %cst_38 : f32 to vector<2x64x32xf32>
    %61 = arith.select %59, %57, %60 : vector<2x64x32xi1>, vector<2x64x32xf32>
    %c0_39 = arith.constant 0 : index
    %c23 = arith.constant 23 : index
    %c0_40 = arith.constant 0 : index
    %62 = vector.load %arg16[%c0_39, %c23, %c0_40] : memref<2x96x32xf32, #tpu.memory_space<vmem>>, vector<2x64x32xf32>
    %cst_41 = arith.constant 0.000000e+00 : f32
    %63 = vector.shape_cast %37 : vector<1x64x1xi1> to vector<1x64x1xi1>
    %64 = vector.broadcast %63 : vector<1x64x1xi1> to vector<2x64x32xi1>
    %65 = vector.broadcast %cst_41 : f32 to vector<2x64x32xf32>
    %66 = arith.select %64, %62, %65 : vector<2x64x32xi1>, vector<2x64x32xf32>
    %c0_42 = arith.constant 0 : index
    %c24 = arith.constant 24 : index
    %c0_43 = arith.constant 0 : index
    %67 = vector.load %arg16[%c0_42, %c24, %c0_43] : memref<2x96x32xf32, #tpu.memory_space<vmem>>, vector<2x64x32xf32>
    %c0_44 = arith.constant 0 : index
    %c25 = arith.constant 25 : index
    %c0_45 = arith.constant 0 : index
    %68 = vector.load %arg16[%c0_44, %c25, %c0_45] : memref<2x96x32xf32, #tpu.memory_space<vmem>>, vector<2x64x32xf32>
    %cst_46 = arith.constant 0.000000e+00 : f32
    %69 = vector.shape_cast %39 : vector<1x64x1xi1> to vector<1x64x1xi1>
    %70 = vector.broadcast %69 : vector<1x64x1xi1> to vector<2x64x32xi1>
    %71 = vector.broadcast %cst_46 : f32 to vector<2x64x32xf32>
    %72 = arith.select %70, %68, %71 : vector<2x64x32xi1>, vector<2x64x32xf32>
    %73 = tpu.concatenate %44, %45, %50, %55, %56, %61, %66, %67, %72 in 2 : vector<2x64x32xf32>, vector<2x64x32xf32>, vector<2x64x32xf32>, vector<2x64x32xf32>, vector<2x64x32xf32>, vector<2x64x32xf32>, vector<2x64x32xf32>, vector<2x64x32xf32>, vector<2x64x32xf32> -> vector<2x64x288xf32>
    %74 = vector.shape_cast %73 : vector<2x64x288xf32> to vector<128x288xf32>
    %75 = arith.truncf %74 : vector<128x288xf32> to vector<128x288xbf16>
    %c0_47 = arith.constant 0 : index
    %c0_48 = arith.constant 0 : index
    %76 = vector.load %arg5[%c0_47, %c0_48] : memref<288x32xbf16, #tpu.memory_space<vmem>>, vector<288x32xbf16>
    %cst_49 = arith.constant dense<0.000000e+00> : vector<128x32xf32>
    %77 = tpu.matmul %75, %76, %cst_49 {dimension_numbers = #tpu.dot_dimension_numbers<[1], [0], [0], [1], [0, 0, 1, 1], [], []>} : vector<128x288xbf16>, vector<288x32xbf16>, vector<128x32xf32> -> vector<128x32xf32>
    %c0_50 = arith.constant 0 : index
    %c0_51 = arith.constant 0 : index
    %78 = vector.load %arg6[%c0_50, %c0_51] : memref<1x32xf32, #tpu.memory_space<vmem>>, vector<1x32xf32>
    %79 = vector.broadcast %78 : vector<1x32xf32> to vector<128x32xf32>
    %80 = arith.mulf %77, %79 : vector<128x32xf32>
    %c0_52 = arith.constant 0 : index
    %c0_53 = arith.constant 0 : index
    %81 = vector.load %arg7[%c0_52, %c0_53] : memref<1x32xf32, #tpu.memory_space<vmem>>, vector<1x32xf32>
    %82 = vector.broadcast %81 : vector<1x32xf32> to vector<128x32xf32>
    %83 = arith.addf %80, %82 : vector<128x32xf32>
    %cst_54 = arith.constant 0.000000e+00 : f32
    %84 = vector.broadcast %cst_54 : f32 to vector<128x32xf32>
    %85 = arith.maximumf %83, %84 : vector<128x32xf32>
    %86 = arith.truncf %85 : vector<128x32xf32> to vector<128x32xbf16>
    %c0_55 = arith.constant 0 : index
    %c0_56 = arith.constant 0 : index
    %87 = vector.load %arg8[%c0_55, %c0_56] : memref<32x128xbf16, #tpu.memory_space<vmem>>, vector<32x128xbf16>
    %cst_57 = arith.constant dense<0.000000e+00> : vector<128x128xf32>
    %88 = tpu.matmul %86, %87, %cst_57 {dimension_numbers = #tpu.dot_dimension_numbers<[1], [0], [0], [1], [0, 0, 1, 1], [], []>} : vector<128x32xbf16>, vector<32x128xbf16>, vector<128x128xf32> -> vector<128x128xf32>
    %c0_58 = arith.constant 0 : index
    %c0_59 = arith.constant 0 : index
    %89 = vector.load %arg9[%c0_58, %c0_59] : memref<1x128xf32, #tpu.memory_space<vmem>>, vector<1x128xf32>
    %90 = vector.broadcast %89 : vector<1x128xf32> to vector<128x128xf32>
    %91 = arith.mulf %88, %90 : vector<128x128xf32>
    %c0_60 = arith.constant 0 : index
    %c0_61 = arith.constant 0 : index
    %92 = vector.load %arg10[%c0_60, %c0_61] : memref<1x128xf32, #tpu.memory_space<vmem>>, vector<1x128xf32>
    %93 = vector.broadcast %92 : vector<1x128xf32> to vector<128x128xf32>
    %94 = arith.addf %91, %93 : vector<128x128xf32>
    %95 = vector.shape_cast %94 : vector<128x128xf32> to vector<2x64x128xf32>
    %cst_62 = arith.constant dense<0.000000e+00> : vector<2x128xf32>
    %96 = vector.multi_reduction <add>, %95, %cst_62 [1] : vector<2x64x128xf32> to vector<2x128xf32>
    %cst_63 = arith.constant 1.562500e-02 : f32
    %97 = vector.broadcast %cst_63 : f32 to vector<2x128xf32>
    %98 = arith.mulf %96, %97 : vector<2x128xf32>
    %99 = arith.truncf %98 : vector<2x128xf32> to vector<2x128xbf16>
    %c0_64 = arith.constant 0 : index
    %c0_65 = arith.constant 0 : index
    %100 = vector.load %arg11[%c0_64, %c0_65] : memref<128x8xbf16, #tpu.memory_space<vmem>>, vector<128x8xbf16>
    %cst_66 = arith.constant dense<0.000000e+00> : vector<2x8xf32>
    %101 = tpu.matmul %99, %100, %cst_66 {dimension_numbers = #tpu.dot_dimension_numbers<[1], [0], [0], [1], [0, 0, 1, 1], [], []>} : vector<2x128xbf16>, vector<128x8xbf16>, vector<2x8xf32> -> vector<2x8xf32>
    %c0_67 = arith.constant 0 : index
    %c0_68 = arith.constant 0 : index
    %102 = vector.load %arg12[%c0_67, %c0_68] : memref<1x8xf32, #tpu.memory_space<vmem>>, vector<1x8xf32>
    %103 = vector.broadcast %102 : vector<1x8xf32> to vector<2x8xf32>
    %104 = arith.addf %101, %103 : vector<2x8xf32>
    %cst_69 = arith.constant 0.000000e+00 : f32
    %105 = vector.broadcast %cst_69 : f32 to vector<2x8xf32>
    %106 = arith.maximumf %104, %105 : vector<2x8xf32>
    %107 = arith.truncf %106 : vector<2x8xf32> to vector<2x8xbf16>
    %c0_70 = arith.constant 0 : index
    %c0_71 = arith.constant 0 : index
    %108 = vector.load %arg13[%c0_70, %c0_71] : memref<8x128xbf16, #tpu.memory_space<vmem>>, vector<8x128xbf16>
    %cst_72 = arith.constant dense<0.000000e+00> : vector<2x128xf32>
    %109 = tpu.matmul %107, %108, %cst_72 {dimension_numbers = #tpu.dot_dimension_numbers<[1], [0], [0], [1], [0, 0, 1, 1], [], []>} : vector<2x8xbf16>, vector<8x128xbf16>, vector<2x128xf32> -> vector<2x128xf32>
    %c0_73 = arith.constant 0 : index
    %c0_74 = arith.constant 0 : index
    %110 = vector.load %arg14[%c0_73, %c0_74] : memref<1x128xf32, #tpu.memory_space<vmem>>, vector<1x128xf32>
    %111 = vector.broadcast %110 : vector<1x128xf32> to vector<2x128xf32>
    %112 = arith.addf %109, %111 : vector<2x128xf32>
    %113 = arith.negf %112 : vector<2x128xf32>
    %114 = math.exp %113 : vector<2x128xf32>
    %cst_75 = arith.constant 1.000000e+00 : f32
    %115 = vector.broadcast %cst_75 : f32 to vector<2x128xf32>
    %116 = arith.addf %115, %114 : vector<2x128xf32>
    %117 = arith.divf %115, %116 : vector<2x128xf32>
    %118 = vector.shape_cast %117 : vector<2x128xf32> to vector<2x1x128xf32>
    %119 = vector.broadcast %118 : vector<2x1x128xf32> to vector<2x64x128xf32>
    %120 = arith.mulf %95, %119 : vector<2x64x128xf32>
    %121 = arith.addf %120, %0 : vector<2x64x128xf32>
    %cst_76 = arith.constant 0.000000e+00 : f32
    %122 = vector.broadcast %cst_76 : f32 to vector<2x64x128xf32>
    %123 = arith.maximumf %121, %122 : vector<2x64x128xf32>
    %c0_77 = arith.constant 0 : index
    %c0_78 = arith.constant 0 : index
    %c0_79 = arith.constant 0 : index
    %124 = vector.load %arg15[%c0_77, %c0_78, %c0_79] : memref<2x64x128xf32, #tpu.memory_space<vmem>>, vector<2x64x128xf32>
    tpu.vector_store %arg15[%c0_77, %c0_78, %c0_79], %123 {strides = array<i32>} : memref<2x64x128xf32, #tpu.memory_space<vmem>>, vector<2x64x128xf32>,
    return
  }
  func.func @transform_0(%arg0: i32) -> (i32, i32, i32) {
    %c0_i32 = arith.constant 0 : i32
    %c0_i32_0 = arith.constant 0 : i32
    %c0_i32_1 = arith.constant 0 : i32
    return %arg0, %c0_i32, %c0_i32_0 : i32, i32, i32
  }
  func.func @transform_1(%arg0: i32) -> (i32, i32) {
    %c0_i32 = arith.constant 0 : i32
    %c0_i32_0 = arith.constant 0 : i32
    %c0_i32_1 = arith.constant 0 : i32
    return %c0_i32, %c0_i32_0 : i32, i32
  }
  func.func @transform_2(%arg0: i32) -> (i32, i32) {
    %c0_i32 = arith.constant 0 : i32
    %c0_i32_0 = arith.constant 0 : i32
    %c0_i32_1 = arith.constant 0 : i32
    return %c0_i32, %c0_i32_0 : i32, i32
  }
  func.func @transform_3(%arg0: i32) -> (i32, i32) {
    %c0_i32 = arith.constant 0 : i32
    %c0_i32_0 = arith.constant 0 : i32
    %c0_i32_1 = arith.constant 0 : i32
    return %c0_i32, %c0_i32_0 : i32, i32
  }
  func.func @transform_4(%arg0: i32) -> (i32, i32) {
    %c0_i32 = arith.constant 0 : i32
    %c0_i32_0 = arith.constant 0 : i32
    %c0_i32_1 = arith.constant 0 : i32
    return %c0_i32, %c0_i32_0 : i32, i32
  }
  func.func @transform_5(%arg0: i32) -> (i32, i32) {
    %c0_i32 = arith.constant 0 : i32
    %c0_i32_0 = arith.constant 0 : i32
    %c0_i32_1 = arith.constant 0 : i32
    return %c0_i32, %c0_i32_0 : i32, i32
  }
  func.func @transform_6(%arg0: i32) -> (i32, i32) {
    %c0_i32 = arith.constant 0 : i32
    %c0_i32_0 = arith.constant 0 : i32
    %c0_i32_1 = arith.constant 0 : i32
    return %c0_i32, %c0_i32_0 : i32, i32
  }
  func.func @transform_7(%arg0: i32) -> (i32, i32) {
    %c0_i32 = arith.constant 0 : i32
    %c0_i32_0 = arith.constant 0 : i32
    %c0_i32_1 = arith.constant 0 : i32
    return %c0_i32, %c0_i32_0 : i32, i32
  }
  func.func @transform_8(%arg0: i32) -> (i32, i32) {
    %c0_i32 = arith.constant 0 : i32
    %c0_i32_0 = arith.constant 0 : i32
    %c0_i32_1 = arith.constant 0 : i32
    return %c0_i32, %c0_i32_0 : i32, i32
  }
  func.func @transform_9(%arg0: i32) -> (i32, i32) {
    %c0_i32 = arith.constant 0 : i32
    %c0_i32_0 = arith.constant 0 : i32
    %c0_i32_1 = arith.constant 0 : i32
    return %c0_i32, %c0_i32_0 : i32, i32
  }
  func.func @transform_10(%arg0: i32) -> (i32, i32) {
    %c0_i32 = arith.constant 0 : i32
    %c0_i32_0 = arith.constant 0 : i32
    %c0_i32_1 = arith.constant 0 : i32
    return %c0_i32, %c0_i32_0 : i32, i32
  }
  func.func @transform_11(%arg0: i32) -> (i32, i32) {
    %c0_i32 = arith.constant 0 : i32
    %c0_i32_0 = arith.constant 0 : i32
    %c0_i32_1 = arith.constant 0 : i32
    return %c0_i32, %c0_i32_0 : i32, i32
  }
  func.func @transform_12(%arg0: i32) -> (i32, i32) {
    %c0_i32 = arith.constant 0 : i32
    %c0_i32_0 = arith.constant 0 : i32
    %c0_i32_1 = arith.constant 0 : i32
    return %c0_i32, %c0_i32_0 : i32, i32
  }
  func.func @transform_13(%arg0: i32) -> (i32, i32) {
    %c0_i32 = arith.constant 0 : i32
    %c0_i32_0 = arith.constant 0 : i32
    %c0_i32_1 = arith.constant 0 : i32
    return %c0_i32, %c0_i32_0 : i32, i32
  }
  func.func @transform_14(%arg0: i32) -> (i32, i32, i32) {
    %c0_i32 = arith.constant 0 : i32
    %c0_i32_0 = arith.constant 0 : i32
    %c0_i32_1 = arith.constant 0 : i32
    return %arg0, %c0_i32, %c0_i32_0 : i32, i32, i32
  }
}

</mosaic_0001>

<llo_original>
// kernel: tpu_custom_call.1
$region0: #{tpu_custom_call.1}
  #allocation0 [shape = 'u32[]', space=smem, size = 0x4, offset = 0x4, fixed_abs, tag = 'smem constant byte address 0x4 - core index']
  #allocation1 [shape = 'u32[144,128]{1,0:T(1,128)}', space=vmem, size = 0x12000, scoped, tag = 'internal scratch']
  #allocation2 [shape = 'f32[2,96,32]{2,1,0:T(8,128)}', space=vmem, size = 0x18000, scoped, tag = 'scratch operand']
  %s0 = inlined_call_operand.vmem [shape: f32[2,64,128], index: 0, kind: input, shape index: {}]
  %s1 = inlined_call_operand.vmem [shape: bf16[128,32], index: 1, kind: input, shape index: {}]
  %s2 = inlined_call_operand.vmem [shape: f32[1,32], index: 2, kind: input, shape index: {}]
  %s3 = inlined_call_operand.vmem [shape: f32[1,32], index: 3, kind: input, shape index: {}]
  %s4 = inlined_call_operand.vmem [shape: bf16[288,32], index: 4, kind: input, shape index: {}]
  %s5 = inlined_call_operand.vmem [shape: f32[1,32], index: 5, kind: input, shape index: {}]
  %s6 = inlined_call_operand.vmem [shape: f32[1,32], index: 6, kind: input, shape index: {}]
  %s7 = inlined_call_operand.vmem [shape: bf16[32,128], index: 7, kind: input, shape index: {}]
  %s8 = inlined_call_operand.vmem [shape: f32[1,128], index: 8, kind: input, shape index: {}]
  %s9 = inlined_call_operand.vmem [shape: f32[1,128], index: 9, kind: input, shape index: {}]
  %s10 = inlined_call_operand.vmem [shape: bf16[128,8], index: 10, kind: input, shape index: {}]
  %s11 = inlined_call_operand.vmem [shape: f32[1,8], index: 11, kind: input, shape index: {}]
  %s12 = inlined_call_operand.vmem [shape: bf16[8,128], index: 12, kind: input, shape index: {}]
  %s13 = inlined_call_operand.vmem [shape: f32[1,128], index: 13, kind: input, shape index: {}]
  %s14 = inlined_call_operand.hbm [shape: f32[2,64,128], index: 14, kind: output, shape index: {}]
  %s15 = sld [smem:[#allocation0]]
  $region66: #{tpu_custom_call.1} parent=0
    _
  %s17 = ssub.s32 1, %s15
  %s18 = scalar_select 0, %s17, %s15
  $region1: #{tpu_custom_call.1} parent=0
    #allocation3 [shape = 'u8[65536]{0}', space=vmem, size = 0x10000, scoped, tag = 'output window, operand 0, single buffered']
    #allocation4 [shape = 's32[1]{0}', space=sflag, size = 0x4, scoped, tag = 'scoped memory for tpu_custom_call.1']
    %19 = vsyncpa [#allocation4], 0
    // Predicated region
    $region2: #{tpu_custom_call.1} parent=1 // pred_check
      _
    $region3: #{tpu_custom_call.1} parent=1 // pred_check_branch
      %21 = sbr.rel (0) target = $region5
    $region4: #{tpu_custom_call.1} parent=1 // pred_region
      _
    $region5: #{tpu_custom_call.1} parent=1 // pred_fallthru
      _
    // Predicated region
    $region6: #{tpu_custom_call.1} parent=1 // pred_check
      _
    $region7: #{tpu_custom_call.1} parent=1 // pred_check_branch
      %23 = sbr.rel (0) target = $region9
    $region8: #{tpu_custom_call.1} parent=1 // pred_region
      _
    $region9: #{tpu_custom_call.1} parent=1 // pred_fallthru
      _
    // Predicated region
    $region10: #{tpu_custom_call.1} parent=1 // pred_check
      _
    $region11: #{tpu_custom_call.1} parent=1 // pred_check_branch
      %25 = sbr.rel (0) target = $region13
    $region12: #{tpu_custom_call.1} parent=1 // pred_region
      _
    $region13: #{tpu_custom_call.1} parent=1 // pred_fallthru
      _
    // Predicated region
    $region14: #{tpu_custom_call.1} parent=1 // pred_check
      _
    $region15: #{tpu_custom_call.1} parent=1 // pred_check_branch
      %27 = sbr.rel (0) target = $region17
    $region16: #{tpu_custom_call.1} parent=1 // pred_region
      _
    $region17: #{tpu_custom_call.1} parent=1 // pred_fallthru
      _
    // Predicated region
    $region18: #{tpu_custom_call.1} parent=1 // pred_check
      _
    $region19: #{tpu_custom_call.1} parent=1 // pred_check_branch
      %29 = sbr.rel (0) target = $region21
    $region20: #{tpu_custom_call.1} parent=1 // pred_region
      _
    $region21: #{tpu_custom_call.1} parent=1 // pred_fallthru
      _
    // Predicated region
    $region22: #{tpu_custom_call.1} parent=1 // pred_check
      _
    $region23: #{tpu_custom_call.1} parent=1 // pred_check_branch
      %31 = sbr.rel (0) target = $region25
    $region24: #{tpu_custom_call.1} parent=1 // pred_region
      _
    $region25: #{tpu_custom_call.1} parent=1 // pred_fallthru
      _
    // Predicated region
    $region26: #{tpu_custom_call.1} parent=1 // pred_check
      _
    $region27: #{tpu_custom_call.1} parent=1 // pred_check_branch
      %33 = sbr.rel (0) target = $region29
    $region28: #{tpu_custom_call.1} parent=1 // pred_region
      _
    $region29: #{tpu_custom_call.1} parent=1 // pred_fallthru
      _
    // Predicated region
    $region30: #{tpu_custom_call.1} parent=1 // pred_check
      _
    $region31: #{tpu_custom_call.1} parent=1 // pred_check_branch
      %35 = sbr.rel (0) target = $region33
    $region32: #{tpu_custom_call.1} parent=1 // pred_region
      _
    $region33: #{tpu_custom_call.1} parent=1 // pred_fallthru
      _
    // Predicated region
    $region34: #{tpu_custom_call.1} parent=1 // pred_check
      _
    $region35: #{tpu_custom_call.1} parent=1 // pred_check_branch
      %37 = sbr.rel (0) target = $region37
    $region36: #{tpu_custom_call.1} parent=1 // pred_region
      _
    $region37: #{tpu_custom_call.1} parent=1 // pred_fallthru
      _
    // Predicated region
    $region38: #{tpu_custom_call.1} parent=1 // pred_check
      _
    $region39: #{tpu_custom_call.1} parent=1 // pred_check_branch
      %39 = sbr.rel (0) target = $region41
    $region40: #{tpu_custom_call.1} parent=1 // pred_region
      _
    $region41: #{tpu_custom_call.1} parent=1 // pred_fallthru
      _
    // Predicated region
    $region42: #{tpu_custom_call.1} parent=1 // pred_check
      _
    $region43: #{tpu_custom_call.1} parent=1 // pred_check_branch
      %41 = sbr.rel (0) target = $region45
    $region44: #{tpu_custom_call.1} parent=1 // pred_region
      _
    $region45: #{tpu_custom_call.1} parent=1 // pred_fallthru
      _
    // Predicated region
    $region46: #{tpu_custom_call.1} parent=1 // pred_check
      _
    $region47: #{tpu_custom_call.1} parent=1 // pred_check_branch
      %43 = sbr.rel (0) target = $region49
    $region48: #{tpu_custom_call.1} parent=1 // pred_region
      _
    $region49: #{tpu_custom_call.1} parent=1 // pred_fallthru
      _
    // Predicated region
    $region50: #{tpu_custom_call.1} parent=1 // pred_check
      _
    $region51: #{tpu_custom_call.1} parent=1 // pred_check_branch
      %45 = sbr.rel (0) target = $region53
    $region52: #{tpu_custom_call.1} parent=1 // pred_region
      _
    $region53: #{tpu_custom_call.1} parent=1 // pred_fallthru
      _
    // Predicated region
    $region54: #{tpu_custom_call.1} parent=1 // pred_check
      _
    $region55: #{tpu_custom_call.1} parent=1 // pred_check_branch
      %47 = sbr.rel (0) target = $region57
    $region56: #{tpu_custom_call.1} parent=1 // pred_region
      _
    $region57: #{tpu_custom_call.1} parent=1 // pred_fallthru
      _
    %v49 = vld [vmem:[%s0] sm:$0xff]
    %v50 = vld [vmem:[%s0 + $0x8] sm:$0xff]
    %v51 = vld [vmem:[%s0 + $0x10] sm:$0xff]
    %v52 = vld [vmem:[%s0 + $0x18] sm:$0xff]
    %v53 = vld [vmem:[%s0 + $0x20] sm:$0xff]
    %v54 = vld [vmem:[%s0 + $0x28] sm:$0xff]
    %v55 = vld [vmem:[%s0 + $0x30] sm:$0xff]
    %v56 = vld [vmem:[%s0 + $0x38] sm:$0xff]
    %v57 = vld [vmem:[%s0 + $0x40] sm:$0xff]
    %v58 = vld [vmem:[%s0 + $0x48] sm:$0xff]
    %v59 = vld [vmem:[%s0 + $0x50] sm:$0xff]
    %v60 = vld [vmem:[%s0 + $0x58] sm:$0xff]
    %v61 = vld [vmem:[%s0 + $0x60] sm:$0xff]
    %v62 = vld [vmem:[%s0 + $0x68] sm:$0xff]
    %v63 = vld [vmem:[%s0 + $0x70] sm:$0xff]
    %v64 = vld [vmem:[%s0 + $0x78] sm:$0xff]
    %v65 = vpack.c.bf16 %v50, %v49
    %v66 = vpack.c.bf16 %v52, %v51
    %v67 = vpack.c.bf16 %v54, %v53
    %v68 = vpack.c.bf16 %v56, %v55
    %v69 = vpack.c.bf16 %v58, %v57
    %v70 = vpack.c.bf16 %v60, %v59
    %v71 = vpack.c.bf16 %v62, %v61
    %v72 = vpack.c.bf16 %v64, %v63
    %v73 = vld [vmem:[%s1] sm:$0xf]
    %v74 = vld [vmem:[%s1 + $0x4] sm:$0xf]
    %v75 = vld [vmem:[%s1 + $0x8] sm:$0xf]
    %v76 = vld [vmem:[%s1 + $0xc] sm:$0xf]
    %v77 = vld [vmem:[%s1 + $0x10] sm:$0xf]
    %v78 = vld [vmem:[%s1 + $0x14] sm:$0xf]
    %v79 = vld [vmem:[%s1 + $0x18] sm:$0xf]
    %v80 = vld [vmem:[%s1 + $0x1c] sm:$0xf]
    %v81 = vld [vmem:[%s1 + $0x20] sm:$0xf]
    %v82 = vld [vmem:[%s1 + $0x24] sm:$0xf]
    %v83 = vld [vmem:[%s1 + $0x28] sm:$0xf]
    %v84 = vld [vmem:[%s1 + $0x2c] sm:$0xf]
    %v85 = vld [vmem:[%s1 + $0x30] sm:$0xf]
    %v86 = vld [vmem:[%s1 + $0x34] sm:$0xf]
    %v87 = vld [vmem:[%s1 + $0x38] sm:$0xf]
    %v88 = vld [vmem:[%s1 + $0x3c] sm:$0xf]
    %v105 = vunpack.c.l.b16 %v73
    %v106 = vunpack.c.l.b16 %v74
    %v107 = vunpack.c.l.b16 %v75
    %v108 = vunpack.c.l.b16 %v76
    %v109 = vunpack.c.l.b16 %v77
    %v110 = vunpack.c.l.b16 %v78
    %v111 = vunpack.c.l.b16 %v79
    %v112 = vunpack.c.l.b16 %v80
    %v113 = vunpack.c.l.b16 %v81
    %v114 = vunpack.c.l.b16 %v82
    %v115 = vunpack.c.l.b16 %v83
    %v116 = vunpack.c.l.b16 %v84
    %v117 = vunpack.c.l.b16 %v85
    %v118 = vunpack.c.l.b16 %v86
    %v119 = vunpack.c.l.b16 %v87
    %v120 = vunpack.c.l.b16 %v88
    %v121 = vpack.c.b16 %v106, %v105
    %v122 = vpack.c.b16 %v108, %v107
    %v123 = vpack.c.b16 %v110, %v109
    %v124 = vpack.c.b16 %v112, %v111
    %v125 = vpack.c.b16 %v114, %v113
    %v126 = vpack.c.b16 %v116, %v115
    %v127 = vpack.c.b16 %v118, %v117
    %v128 = vpack.c.b16 %v120, %v119
    %137 = vmatprep.subr.bf16.mxu0 0
    %138 = vmatpush1.bf16.msra.mxu0 %v121
    %139 = vmatprep.subr.bf16.mxu0 0
    %140 = vmatpush1.bf16.msra.mxu0 %v122
    %141 = vmatprep.subr.bf16.mxu0 0
    %142 = vmatpush1.bf16.msra.mxu0 %v123
    %143 = vmatprep.subr.bf16.mxu0 0
    %144 = vmatpush1.bf16.msra.mxu0 %v124
    %145 = vmatprep.subr.bf16.mxu0 0
    %146 = vmatpush1.bf16.msra.mxu0 %v125
    %147 = vmatprep.subr.bf16.mxu0 0
    %148 = vmatpush1.bf16.msra.mxu0 %v126
    %149 = vmatprep.subr.bf16.mxu0 0
    %150 = vmatpush1.bf16.msra.mxu0 %v127
    %151 = vmatprep.subr.bf16.mxu0 0
    %152 = vmatpush1.bf16.msra.mxu0 %v128
    %153 = vmatprep.subr.bf16.mxu0 0
    %154 = vmatpush1.bf16.msra.mxu0 0
    %155 = vmatprep.subr.bf16.mxu0 0
    %156 = vmatpush1.bf16.msra.mxu0 0
    %157 = vmatprep.subr.bf16.mxu0 0
    %158 = vmatpush1.bf16.msra.mxu0 0
    %159 = vmatprep.subr.bf16.mxu0 0
    %160 = vmatpush1.bf16.msra.mxu0 0
    %161 = vmatprep.subr.bf16.mxu0 0
    %162 = vmatpush1.bf16.msra.mxu0 0
    %163 = vmatprep.subr.bf16.mxu0 0
    %164 = vmatpush1.bf16.msra.mxu0 0
    %165 = vmatprep.subr.bf16.mxu0 0
    %166 = vmatpush1.bf16.msra.mxu0 0
    %167 = vmatprep.subr.bf16.mxu0 0
    %168 = vmatpush1.bf16.msra.mxu0 0
    %169 = vmatprep.mubr.bf16.mxu0 0
    %170 = vmatmul.mubr.bf16.gmra.mrb[0].mxu0 %v65
    %v171 = vpop.f32.mrb[0].mxu0
    %v172 = vadd.f32 0.0, %v171
    %v173 = vpop.f32.mrb[0].mxu0
    %v174 = vpop.f32.mrb[0].mxu0
    %v175 = vadd.f32 0.0, %v174
    %v176 = vpop.f32.mrb[0].mxu0
    %177 = vmatprep.mubr.bf16.mxu0 0
    %178 = vmatmul.mubr.bf16.gmra.mrb[0].mxu0 %v66
    %v179 = vpop.f32.mrb[0].mxu0
    %v180 = vadd.f32 0.0, %v179
    %v181 = vpop.f32.mrb[0].mxu0
    %v182 = vpop.f32.mrb[0].mxu0
    %v183 = vadd.f32 0.0, %v182
    %v184 = vpop.f32.mrb[0].mxu0
    %185 = vmatprep.mubr.bf16.mxu0 0
    %186 = vmatmul.mubr.bf16.gmra.mrb[0].mxu0 %v67
    %v187 = vpop.f32.mrb[0].mxu0
    %v188 = vadd.f32 0.0, %v187
    %v189 = vpop.f32.mrb[0].mxu0
    %v190 = vpop.f32.mrb[0].mxu0
    %v191 = vadd.f32 0.0, %v190
    %v192 = vpop.f32.mrb[0].mxu0
    %193 = vmatprep.mubr.bf16.mxu0 0
    %194 = vmatmul.mubr.bf16.gmra.mrb[0].mxu0 %v68
    %v195 = vpop.f32.mrb[0].mxu0
    %v196 = vadd.f32 0.0, %v195
    %v197 = vpop.f32.mrb[0].mxu0
    %v198 = vpop.f32.mrb[0].mxu0
    %v199 = vadd.f32 0.0, %v198
    %v200 = vpop.f32.mrb[0].mxu0
    %201 = vmatprep.mubr.bf16.mxu0 0
    %202 = vmatmul.mubr.bf16.gmra.mrb[0].mxu0 %v69
    %v203 = vpop.f32.mrb[0].mxu0
    %v204 = vadd.f32 0.0, %v203
    %v205 = vpop.f32.mrb[0].mxu0
    %v206 = vpop.f32.mrb[0].mxu0
    %v207 = vadd.f32 0.0, %v206
    %v208 = vpop.f32.mrb[0].mxu0
    %209 = vmatprep.mubr.bf16.mxu0 0
    %210 = vmatmul.mubr.bf16.gmra.mrb[0].mxu0 %v70
    %v211 = vpop.f32.mrb[0].mxu0
    %v212 = vadd.f32 0.0, %v211
    %v213 = vpop.f32.mrb[0].mxu0
    %v214 = vpop.f32.mrb[0].mxu0
    %v215 = vadd.f32 0.0, %v214
    %v216 = vpop.f32.mrb[0].mxu0
    %217 = vmatprep.mubr.bf16.mxu0 0
    %218 = vmatmul.mubr.bf16.gmra.mrb[0].mxu0 %v71
    %v219 = vpop.f32.mrb[0].mxu0
    %v220 = vadd.f32 0.0, %v219
    %v221 = vpop.f32.mrb[0].mxu0
    %v222 = vpop.f32.mrb[0].mxu0
    %v223 = vadd.f32 0.0, %v222
    %v224 = vpop.f32.mrb[0].mxu0
    %225 = vmatprep.mubr.bf16.mxu0 0
    %226 = vmatmul.mubr.bf16.gmra.mrb[0].mxu0 %v72
    %v227 = vpop.f32.mrb[0].mxu0
    %v228 = vadd.f32 0.0, %v227
    %v229 = vpop.f32.mrb[0].mxu0
    %v230 = vpop.f32.mrb[0].mxu0
    %v231 = vadd.f32 0.0, %v230
    %v232 = vpop.f32.mrb[0].mxu0
    %233 = vdwg.mxu0
    %v234 = vld [vmem:[%s2] sm:$0x1]
    %v236 = vlaneseq
    %v237 = vshrl.u32 %v236, 7
    %v238 = vsub.s32 0, %v237
    %v239 = vrot.slane %v234, %v238
    %v241 = vmul.f32 %v172, %v239
    %v242 = vmul.f32 %v175, %v239
    %v243 = vmul.f32 %v180, %v239
    %v244 = vmul.f32 %v183, %v239
    %v245 = vmul.f32 %v188, %v239
    %v246 = vmul.f32 %v191, %v239
    %v247 = vmul.f32 %v196, %v239
    %v248 = vmul.f32 %v199, %v239
    %v249 = vmul.f32 %v204, %v239
    %v250 = vmul.f32 %v207, %v239
    %v251 = vmul.f32 %v212, %v239
    %v252 = vmul.f32 %v215, %v239
    %v253 = vmul.f32 %v220, %v239
    %v254 = vmul.f32 %v223, %v239
    %v255 = vmul.f32 %v228, %v239
    %v256 = vmul.f32 %v231, %v239
    %v257 = vld [vmem:[%s3] sm:$0x1]
    %v259 = vlaneseq
    %v260 = vshrl.u32 %v259, 7
    %v261 = vsub.s32 0, %v260
    %v262 = vrot.slane %v257, %v261
    %v264 = vadd.f32 %v241, %v262
    %v265 = vadd.f32 %v242, %v262
    %v266 = vadd.f32 %v243, %v262
    %v267 = vadd.f32 %v244, %v262
    %v268 = vadd.f32 %v245, %v262
    %v269 = vadd.f32 %v246, %v262
    %v270 = vadd.f32 %v247, %v262
    %v271 = vadd.f32 %v248, %v262
    %v272 = vadd.f32 %v249, %v262
    %v273 = vadd.f32 %v250, %v262
    %v274 = vadd.f32 %v251, %v262
    %v275 = vadd.f32 %v252, %v262
    %v276 = vadd.f32 %v253, %v262
    %v277 = vadd.f32 %v254, %v262
    %v278 = vadd.f32 %v255, %v262
    %v279 = vadd.f32 %v256, %v262
    %v280 = vmax.f32 %v264, 0.0
    %v281 = vmax.f32 %v265, 0.0
    %v282 = vmax.f32 %v266, 0.0
    %v283 = vmax.f32 %v267, 0.0
    %v284 = vmax.f32 %v268, 0.0
    %v285 = vmax.f32 %v269, 0.0
    %v286 = vmax.f32 %v270, 0.0
    %v287 = vmax.f32 %v271, 0.0
    %v288 = vmax.f32 %v272, 0.0
    %v289 = vmax.f32 %v273, 0.0
    %v290 = vmax.f32 %v274, 0.0
    %v291 = vmax.f32 %v275, 0.0
    %v292 = vmax.f32 %v276, 0.0
    %v293 = vmax.f32 %v277, 0.0
    %v294 = vmax.f32 %v278, 0.0
    %v295 = vmax.f32 %v279, 0.0
    %vm296 = vcmask 261120
    %297 = vst.msk [vmem:[#allocation2] sm:$0xff] %vm296, 0.0
    %298 = vst.msk [vmem:[#allocation2 + $0x8] sm:$0xff] %vm296, 0.0
    %299 = vst.msk [vmem:[#allocation2 + $0x60] sm:$0xff] %vm296, 0.0
    %300 = vst.msk [vmem:[#allocation2 + $0x68] sm:$0xff] %vm296, 0.0
    %301 = vst.msk [vmem:[#allocation2 + $0x50] sm:$0xff] %vm296, 0.0
    %302 = vst.msk [vmem:[#allocation2 + $0x58] sm:$0xff] %vm296, 0.0
    %303 = vst.msk [vmem:[#allocation2 + $0xb0] sm:$0xff] %vm296, 0.0
    %304 = vst.msk [vmem:[#allocation2 + $0xb8] sm:$0xff] %vm296, 0.0
    %305 = vst.msk [vmem:[#allocation2 + $0x10] sm:$0xff] %vm296, %v280
    %306 = vst.msk [vmem:[#allocation2 + $0x18] sm:$0xff] %vm296, %v281
    %307 = vst.msk [vmem:[#allocation2 + $0x20] sm:$0xff] %vm296, %v282
    %308 = vst.msk [vmem:[#allocation2 + $0x28] sm:$0xff] %vm296, %v283
    %309 = vst.msk [vmem:[#allocation2 + $0x30] sm:$0xff] %vm296, %v284
    %310 = vst.msk [vmem:[#allocation2 + $0x38] sm:$0xff] %vm296, %v285
    %311 = vst.msk [vmem:[#allocation2 + $0x40] sm:$0xff] %vm296, %v286
    %312 = vst.msk [vmem:[#allocation2 + $0x48] sm:$0xff] %vm296, %v287
    %313 = vst.msk [vmem:[#allocation2 + $0x70] sm:$0xff] %vm296, %v288
    %314 = vst.msk [vmem:[#allocation2 + $0x78] sm:$0xff] %vm296, %v289
    %315 = vst.msk [vmem:[#allocation2 + $0x80] sm:$0xff] %vm296, %v290
    %316 = vst.msk [vmem:[#allocation2 + $0x88] sm:$0xff] %vm296, %v291
    %317 = vst.msk [vmem:[#allocation2 + $0x90] sm:$0xff] %vm296, %v292
    %318 = vst.msk [vmem:[#allocation2 + $0x98] sm:$0xff] %vm296, %v293
    %319 = vst.msk [vmem:[#allocation2 + $0xa0] sm:$0xff] %vm296, %v294
    %320 = vst.msk [vmem:[#allocation2 + $0xa8] sm:$0xff] %vm296, %v295
    %v321 = vlaneseq
    %v322 = vshrl.u32 %v321, 7
    %v323 = vadd.s32 %v322, 8
    %v324 = vadd.s32 %v322, 16
    %v325 = vadd.s32 %v322, 24
    %v326 = vadd.s32 %v322, 32
    %v327 = vadd.s32 %v322, 40
    %v328 = vadd.s32 %v322, 48
    %v329 = vadd.s32 %v322, 56
    %vm330 = vcmp.lt.s32.totalorder %v322, 0
    %v331 = vsub.s32 0, %v322
    %v332 = vsel %vm330, %v331, %v322
    %v333 = vshrl.u32 %v332, 3
    %v334 = vand.u32 %v332, 7
    %v335 = vsub.s32 0, %v334
    %v336 = vsel %vm330, %v335, %v334
    %vm337 = vcmp.lt.s32.totalorder %v323, 0
    %v338 = vsub.s32 0, %v323
    %v339 = vsel %vm337, %v338, %v323
    %v340 = vshrl.u32 %v339, 3
    %v341 = vand.u32 %v339, 7
    %v342 = vsub.s32 0, %v341
    %v343 = vsel %vm337, %v342, %v341
    %vm344 = vcmp.lt.s32.totalorder %v324, 0
    %v345 = vsub.s32 0, %v324
    %v346 = vsel %vm344, %v345, %v324
    %v347 = vshrl.u32 %v346, 3
    %v348 = vand.u32 %v346, 7
    %v349 = vsub.s32 0, %v348
    %v350 = vsel %vm344, %v349, %v348
    %vm351 = vcmp.lt.s32.totalorder %v325, 0
    %v352 = vsub.s32 0, %v325
    %v353 = vsel %vm351, %v352, %v325
    %v354 = vshrl.u32 %v353, 3
    %v355 = vand.u32 %v353, 7
    %v356 = vsub.s32 0, %v355
    %v357 = vsel %vm351, %v356, %v355
    %vm358 = vcmp.lt.s32.totalorder %v326, 0
    %v359 = vsub.s32 0, %v326
    %v360 = vsel %vm358, %v359, %v326
    %v361 = vshrl.u32 %v360, 3
    %v362 = vand.u32 %v360, 7
    %v363 = vsub.s32 0, %v362
    %v364 = vsel %vm358, %v363, %v362
    %vm365 = vcmp.lt.s32.totalorder %v327, 0
    %v366 = vsub.s32 0, %v327
    %v367 = vsel %vm365, %v366, %v327
    %v368 = vshrl.u32 %v367, 3
    %v369 = vand.u32 %v367, 7
    %v370 = vsub.s32 0, %v369
    %v371 = vsel %vm365, %v370, %v369
    %vm372 = vcmp.lt.s32.totalorder %v328, 0
    %v373 = vsub.s32 0, %v328
    %v374 = vsel %vm372, %v373, %v328
    %v375 = vshrl.u32 %v374, 3
    %v376 = vand.u32 %v374, 7
    %v377 = vsub.s32 0, %v376
    %v378 = vsel %vm372, %v377, %v376
    %vm379 = vcmp.lt.s32.totalorder %v329, 0
    %v380 = vsub.s32 0, %v329
    %v381 = vsel %vm379, %v380, %v329
    %v382 = vshrl.u32 %v381, 3
    %v383 = vand.u32 %v381, 7
    %v384 = vsub.s32 0, %v383
    %v385 = vsel %vm379, %v384, %v383
    %vm386 = vcmp.ne.s32.totalorder %v336, 0
    %vm387 = vcmp.ne.s32.totalorder %v343, 0
    %vm388 = vcmp.ne.s32.totalorder %v350, 0
    %vm389 = vcmp.ne.s32.totalorder %v357, 0
    %vm390 = vcmp.ne.s32.totalorder %v364, 0
    %vm391 = vcmp.ne.s32.totalorder %v371, 0
    %vm392 = vcmp.ne.s32.totalorder %v378, 0
    %vm393 = vcmp.ne.s32.totalorder %v385, 0
    %vm394 = vcmp.lt.s32.totalorder %v336, 0
    %vm395 = vcmp.lt.s32.totalorder %v343, 0
    %vm396 = vcmp.lt.s32.totalorder %v350, 0
    %vm397 = vcmp.lt.s32.totalorder %v357, 0
    %vm398 = vcmp.lt.s32.totalorder %v364, 0
    %vm399 = vcmp.lt.s32.totalorder %v371, 0
    %vm400 = vcmp.lt.s32.totalorder %v378, 0
    %vm401 = vcmp.lt.s32.totalorder %v385, 0
    %vm402 = vmand %vm394, %vm386
    %vm403 = vmand %vm395, %vm387
    %vm404 = vmand %vm396, %vm388
    %vm405 = vmand %vm397, %vm389
    %vm406 = vmand %vm398, %vm390
    %vm407 = vmand %vm399, %vm391
    %vm408 = vmand %vm400, %vm392
    %vm409 = vmand %vm401, %vm393
    %v410 = vadd.s32 %v336, 8
    %v411 = vadd.s32 %v343, 8
    %v412 = vadd.s32 %v350, 8
    %v413 = vadd.s32 %v357, 8
    %v414 = vadd.s32 %v364, 8
    %v415 = vadd.s32 %v371, 8
    %v416 = vadd.s32 %v378, 8
    %v417 = vadd.s32 %v385, 8
    %v418 = vsel %vm402, %v410, %v336
    %v419 = vsel %vm403, %v411, %v343
    %v420 = vsel %vm404, %v412, %v350
    %v421 = vsel %vm405, %v413, %v357
    %v422 = vsel %vm406, %v414, %v364
    %v423 = vsel %vm407, %v415, %v371
    %v424 = vsel %vm408, %v416, %v378
    %v425 = vsel %vm409, %v417, %v385
    %vm426 = vcmp.ge.s32.totalorder %v418, 1
    %vm427 = vcmp.ge.s32.totalorder %v419, 1
    %vm428 = vcmp.ge.s32.totalorder %v420, 1
    %vm429 = vcmp.ge.s32.totalorder %v421, 1
    %vm430 = vcmp.ge.s32.totalorder %v422, 1
    %vm431 = vcmp.ge.s32.totalorder %v423, 1
    %vm432 = vcmp.ge.s32.totalorder %v424, 1
    %vm433 = vcmp.ge.s32.totalorder %v425, 1
    %vm434 = vcmp.lt.s32.totalorder %v418, 7
    %vm435 = vcmp.lt.s32.totalorder %v419, 7
    %vm436 = vcmp.lt.s32.totalorder %v420, 7
    %vm437 = vcmp.lt.s32.totalorder %v421, 7
    %vm438 = vcmp.lt.s32.totalorder %v422, 7
    %vm439 = vcmp.lt.s32.totalorder %v423, 7
    %vm440 = vcmp.lt.s32.totalorder %v424, 7
    %vm441 = vcmp.lt.s32.totalorder %v425, 7
    %v442 = vld [vmem:[#allocation2 + $0x7] sm:$0xff]
    %v443 = vld [vmem:[#allocation2 + $0xf] sm:$0xff]
    %v444 = vld [vmem:[#allocation2 + $0x17] sm:$0xff]
    %v445 = vld [vmem:[#allocation2 + $0x1f] sm:$0xff]
    %v446 = vld [vmem:[#allocation2 + $0x27] sm:$0xff]
    %v447 = vld [vmem:[#allocation2 + $0x2f] sm:$0xff]
    %v448 = vld [vmem:[#allocation2 + $0x37] sm:$0xff]
    %v449 = vld [vmem:[#allocation2 + $0x3f] sm:$0xff]
    %v450 = vld [vmem:[#allocation2 + $0x67] sm:$0xff]
    %v451 = vld [vmem:[#allocation2 + $0x6f] sm:$0xff]
    %v452 = vld [vmem:[#allocation2 + $0x77] sm:$0xff]
    %v453 = vld [vmem:[#allocation2 + $0x7f] sm:$0xff]
    %v454 = vld [vmem:[#allocation2 + $0x87] sm:$0xff]
    %v455 = vld [vmem:[#allocation2 + $0x8f] sm:$0xff]
    %v456 = vld [vmem:[#allocation2 + $0x97] sm:$0xff]
    %v457 = vld [vmem:[#allocation2 + $0x9f] sm:$0xff]
    %v458 = vsel %vm426, 1, 0
    %v459 = vsel %vm427, 1, 0
    %v460 = vsel %vm428, 1, 0
    %v461 = vsel %vm429, 1, 0
    %v462 = vsel %vm430, 1, 0
    %v463 = vsel %vm431, 1, 0
    %v464 = vsel %vm432, 1, 0
    %v465 = vsel %vm433, 1, 0
    %vm466 = vcmp.eq.s32.totalorder %v458, 1
    %vm467 = vcmp.eq.s32.totalorder %v459, 1
    %vm468 = vcmp.eq.s32.totalorder %v460, 1
    %vm469 = vcmp.eq.s32.totalorder %v461, 1
    %vm470 = vcmp.eq.s32.totalorder %v462, 1
    %vm471 = vcmp.eq.s32.totalorder %v463, 1
    %vm472 = vcmp.eq.s32.totalorder %v464, 1
    %vm473 = vcmp.eq.s32.totalorder %v465, 1
    %v474 = vsel %vm466, %v442, 0.0
    %v475 = vsel %vm467, %v443, 0.0
    %v476 = vsel %vm468, %v444, 0.0
    %v477 = vsel %vm469, %v445, 0.0
    %v478 = vsel %vm470, %v446, 0.0
    %v479 = vsel %vm471, %v447, 0.0
    %v480 = vsel %vm472, %v448, 0.0
    %v481 = vsel %vm473, %v449, 0.0
    %v482 = vsel %vm466, %v450, 0.0
    %v483 = vsel %vm467, %v451, 0.0
    %v484 = vsel %vm468, %v452, 0.0
    %v485 = vsel %vm469, %v453, 0.0
    %v486 = vsel %vm470, %v454, 0.0
    %v487 = vsel %vm471, %v455, 0.0
    %v488 = vsel %vm472, %v456, 0.0
    %v489 = vsel %vm473, %v457, 0.0
    %v490 = vld [vmem:[#allocation2 + $0x8] sm:$0xff]
    %v491 = vld [vmem:[#allocation2 + $0x10] sm:$0xff]
    %v492 = vld [vmem:[#allocation2 + $0x18] sm:$0xff]
    %v493 = vld [vmem:[#allocation2 + $0x20] sm:$0xff]
    %v494 = vld [vmem:[#allocation2 + $0x28] sm:$0xff]
    %v495 = vld [vmem:[#allocation2 + $0x30] sm:$0xff]
    %v496 = vld [vmem:[#allocation2 + $0x38] sm:$0xff]
    %v497 = vld [vmem:[#allocation2 + $0x40] sm:$0xff]
    %v498 = vld [vmem:[#allocation2 + $0x68] sm:$0xff]
    %v499 = vld [vmem:[#allocation2 + $0x70] sm:$0xff]
    %v500 = vld [vmem:[#allocation2 + $0x78] sm:$0xff]
    %v501 = vld [vmem:[#allocation2 + $0x80] sm:$0xff]
    %v502 = vld [vmem:[#allocation2 + $0x88] sm:$0xff]
    %v503 = vld [vmem:[#allocation2 + $0x90] sm:$0xff]
    %v504 = vld [vmem:[#allocation2 + $0x98] sm:$0xff]
    %v505 = vld [vmem:[#allocation2 + $0xa0] sm:$0xff]
    %v506 = vld [vmem:[#allocation2 + $0x9] sm:$0xff]
    %v507 = vld [vmem:[#allocation2 + $0x11] sm:$0xff]
    %v508 = vld [vmem:[#allocation2 + $0x19] sm:$0xff]
    %v509 = vld [vmem:[#allocation2 + $0x21] sm:$0xff]
    %v510 = vld [vmem:[#allocation2 + $0x29] sm:$0xff]
    %v511 = vld [vmem:[#allocation2 + $0x31] sm:$0xff]
    %v512 = vld [vmem:[#allocation2 + $0x39] sm:$0xff]
    %v513 = vld [vmem:[#allocation2 + $0x41] sm:$0xff]
    %v514 = vld [vmem:[#allocation2 + $0x69] sm:$0xff]
    %v515 = vld [vmem:[#allocation2 + $0x71] sm:$0xff]
    %v516 = vld [vmem:[#allocation2 + $0x79] sm:$0xff]
    %v517 = vld [vmem:[#allocation2 + $0x81] sm:$0xff]
    %v518 = vld [vmem:[#allocation2 + $0x89] sm:$0xff]
    %v519 = vld [vmem:[#allocation2 + $0x91] sm:$0xff]
    %v520 = vld [vmem:[#allocation2 + $0x99] sm:$0xff]
    %v521 = vld [vmem:[#allocation2 + $0xa1] sm:$0xff]
    %v522 = vsel %vm434, 1, 0
    %v523 = vsel %vm435, 1, 0
    %v524 = vsel %vm436, 1, 0
    %v525 = vsel %vm437, 1, 0
    %v526 = vsel %vm438, 1, 0
    %v527 = vsel %vm439, 1, 0
    %v528 = vsel %vm440, 1, 0
    %v529 = vsel %vm441, 1, 0
    %vm530 = vcmp.eq.s32.totalorder %v522, 1
    %vm531 = vcmp.eq.s32.totalorder %v523, 1
    %vm532 = vcmp.eq.s32.totalorder %v524, 1
    %vm533 = vcmp.eq.s32.totalorder %v525, 1
    %vm534 = vcmp.eq.s32.totalorder %v526, 1
    %vm535 = vcmp.eq.s32.totalorder %v527, 1
    %vm536 = vcmp.eq.s32.totalorder %v528, 1
    %vm537 = vcmp.eq.s32.totalorder %v529, 1
    %v538 = vsel %vm530, %v506, 0.0
    %v539 = vsel %vm531, %v507, 0.0
    %v540 = vsel %vm532, %v508, 0.0
    %v541 = vsel %vm533, %v509, 0.0
    %v542 = vsel %vm534, %v510, 0.0
    %v543 = vsel %vm535, %v511, 0.0
    %v544 = vsel %vm536, %v512, 0.0
    %v545 = vsel %vm537, %v513, 0.0
    %v546 = vsel %vm530, %v514, 0.0
    %v547 = vsel %vm531, %v515, 0.0
    %v548 = vsel %vm532, %v516, 0.0
    %v549 = vsel %vm533, %v517, 0.0
    %v550 = vsel %vm534, %v518, 0.0
    %v551 = vsel %vm535, %v519, 0.0
    %v552 = vsel %vm536, %v520, 0.0
    %v553 = vsel %vm537, %v521, 0.0
    %v554 = vld [vmem:[#allocation2 + $0x47] sm:$0xff]
    %v555 = vld [vmem:[#allocation2 + $0xa7] sm:$0xff]
    %v556 = vsel %vm466, %v443, 0.0
    %v557 = vsel %vm467, %v444, 0.0
    %v558 = vsel %vm468, %v445, 0.0
    %v559 = vsel %vm469, %v446, 0.0
    %v560 = vsel %vm470, %v447, 0.0
    %v561 = vsel %vm471, %v448, 0.0
    %v562 = vsel %vm472, %v449, 0.0
    %v563 = vsel %vm473, %v554, 0.0
    %v564 = vsel %vm466, %v451, 0.0
    %v565 = vsel %vm467, %v452, 0.0
    %v566 = vsel %vm468, %v453, 0.0
    %v567 = vsel %vm469, %v454, 0.0
    %v568 = vsel %vm470, %v455, 0.0
    %v569 = vsel %vm471, %v456, 0.0
    %v570 = vsel %vm472, %v457, 0.0
    %v571 = vsel %vm473, %v555, 0.0
    %v572 = vld [vmem:[#allocation2 + $0x48] sm:$0xff]
    %v573 = vld [vmem:[#allocation2 + $0xa8] sm:$0xff]
    %v574 = vld [vmem:[#allocation2 + $0x49] sm:$0xff]
    %v575 = vld [vmem:[#allocation2 + $0xa9] sm:$0xff]
    %v576 = vsel %vm530, %v507, 0.0
    %v577 = vsel %vm531, %v508, 0.0
    %v578 = vsel %vm532, %v509, 0.0
    %v579 = vsel %vm533, %v510, 0.0
    %v580 = vsel %vm534, %v511, 0.0
    %v581 = vsel %vm535, %v512, 0.0
    %v582 = vsel %vm536, %v513, 0.0
    %v583 = vsel %vm537, %v574, 0.0
    %v584 = vsel %vm530, %v515, 0.0
    %v585 = vsel %vm531, %v516, 0.0
    %v586 = vsel %vm532, %v517, 0.0
    %v587 = vsel %vm533, %v518, 0.0
    %v588 = vsel %vm534, %v519, 0.0
    %v589 = vsel %vm535, %v520, 0.0
    %v590 = vsel %vm536, %v521, 0.0
    %v591 = vsel %vm537, %v575, 0.0
    %v592 = vld [vmem:[#allocation2 + $0x4f] sm:$0xff]
    %v593 = vld [vmem:[#allocation2 + $0xaf] sm:$0xff]
    %v594 = vsel %vm466, %v444, 0.0
    %v595 = vsel %vm467, %v445, 0.0
    %v596 = vsel %vm468, %v446, 0.0
    %v597 = vsel %vm469, %v447, 0.0
    %v598 = vsel %vm470, %v448, 0.0
    %v599 = vsel %vm471, %v449, 0.0
    %v600 = vsel %vm472, %v554, 0.0
    %v601 = vsel %vm473, %v592, 0.0
    %v602 = vsel %vm466, %v452, 0.0
    %v603 = vsel %vm467, %v453, 0.0
    %v604 = vsel %vm468, %v454, 0.0
    %v605 = vsel %vm469, %v455, 0.0
    %v606 = vsel %vm470, %v456, 0.0
    %v607 = vsel %vm471, %v457, 0.0
    %v608 = vsel %vm472, %v555, 0.0
    %v609 = vsel %vm473, %v593, 0.0
    %v610 = vld [vmem:[#allocation2 + $0x50] sm:$0xff]
    %v611 = vld [vmem:[#allocation2 + $0xb0] sm:$0xff]
    %v612 = vld [vmem:[#allocation2 + $0x51] sm:$0xff]
    %v613 = vld [vmem:[#allocation2 + $0xb1] sm:$0xff]
    %v614 = vsel %vm530, %v508, 0.0
    %v615 = vsel %vm531, %v509, 0.0
    %v616 = vsel %vm532, %v510, 0.0
    %v617 = vsel %vm533, %v511, 0.0
    %v618 = vsel %vm534, %v512, 0.0
    %v619 = vsel %vm535, %v513, 0.0
    %v620 = vsel %vm536, %v574, 0.0
    %v621 = vsel %vm537, %v612, 0.0
    %v622 = vsel %vm530, %v516, 0.0
    %v623 = vsel %vm531, %v517, 0.0
    %v624 = vsel %vm532, %v518, 0.0
    %v625 = vsel %vm533, %v519, 0.0
    %v626 = vsel %vm534, %v520, 0.0
    %v627 = vsel %vm535, %v521, 0.0
    %v628 = vsel %vm536, %v575, 0.0
    %v629 = vsel %vm537, %v613, 0.0
    %646 = vrot.lane.b32.xlu0 %v490, 32
    %v647 = vpop.permute.xlu0 %646
    %648 = vrot.lane.b32.xlu0 %v491, 32
    %v649 = vpop.permute.xlu0 %648
    %650 = vrot.lane.b32.xlu0 %v492, 32
    %v651 = vpop.permute.xlu0 %650
    %652 = vrot.lane.b32.xlu0 %v493, 32
    %v653 = vpop.permute.xlu0 %652
    %654 = vrot.lane.b32.xlu0 %v494, 32
    %v655 = vpop.permute.xlu0 %654
    %656 = vrot.lane.b32.xlu0 %v495, 32
    %v657 = vpop.permute.xlu0 %656
    %658 = vrot.lane.b32.xlu0 %v496, 32
    %v659 = vpop.permute.xlu0 %658
    %660 = vrot.lane.b32.xlu0 %v497, 32
    %v661 = vpop.permute.xlu0 %660
    %662 = vrot.lane.b32.xlu0 %v498, 32
    %v663 = vpop.permute.xlu0 %662
    %664 = vrot.lane.b32.xlu0 %v499, 32
    %v665 = vpop.permute.xlu0 %664
    %666 = vrot.lane.b32.xlu0 %v500, 32
    %v667 = vpop.permute.xlu0 %666
    %668 = vrot.lane.b32.xlu0 %v501, 32
    %v669 = vpop.permute.xlu0 %668
    %670 = vrot.lane.b32.xlu0 %v502, 32
    %v671 = vpop.permute.xlu0 %670
    %672 = vrot.lane.b32.xlu0 %v503, 32
    %v673 = vpop.permute.xlu0 %672
    %674 = vrot.lane.b32.xlu0 %v504, 32
    %v675 = vpop.permute.xlu0 %674
    %676 = vrot.lane.b32.xlu0 %v505, 32
    %v677 = vpop.permute.xlu0 %676
    %710 = vrot.lane.b32.xlu0 %v538, 64
    %v711 = vpop.permute.xlu0 %710
    %712 = vrot.lane.b32.xlu0 %v539, 64
    %v713 = vpop.permute.xlu0 %712
    %714 = vrot.lane.b32.xlu0 %v540, 64
    %v715 = vpop.permute.xlu0 %714
    %716 = vrot.lane.b32.xlu0 %v541, 64
    %v717 = vpop.permute.xlu0 %716
    %718 = vrot.lane.b32.xlu0 %v542, 64
    %v719 = vpop.permute.xlu0 %718
    %720 = vrot.lane.b32.xlu0 %v543, 64
    %v721 = vpop.permute.xlu0 %720
    %722 = vrot.lane.b32.xlu0 %v544, 64
    %v723 = vpop.permute.xlu0 %722
    %724 = vrot.lane.b32.xlu0 %v545, 64
    %v725 = vpop.permute.xlu0 %724
    %726 = vrot.lane.b32.xlu0 %v546, 64
    %v727 = vpop.permute.xlu0 %726
    %728 = vrot.lane.b32.xlu0 %v547, 64
    %v729 = vpop.permute.xlu0 %728
    %730 = vrot.lane.b32.xlu0 %v548, 64
    %v731 = vpop.permute.xlu0 %730
    %732 = vrot.lane.b32.xlu0 %v549, 64
    %v733 = vpop.permute.xlu0 %732
    %734 = vrot.lane.b32.xlu0 %v550, 64
    %v735 = vpop.permute.xlu0 %734
    %736 = vrot.lane.b32.xlu0 %v551, 64
    %v737 = vpop.permute.xlu0 %736
    %738 = vrot.lane.b32.xlu0 %v552, 64
    %v739 = vpop.permute.xlu0 %738
    %740 = vrot.lane.b32.xlu0 %v553, 64
    %v741 = vpop.permute.xlu0 %740
    %774 = vrot.lane.b32.xlu0 %v556, 96
    %v775 = vpop.permute.xlu0 %774
    %776 = vrot.lane.b32.xlu0 %v557, 96
    %v777 = vpop.permute.xlu0 %776
    %778 = vrot.lane.b32.xlu0 %v558, 96
    %v779 = vpop.permute.xlu0 %778
    %780 = vrot.lane.b32.xlu0 %v559, 96
    %v781 = vpop.permute.xlu0 %780
    %782 = vrot.lane.b32.xlu0 %v560, 96
    %v783 = vpop.permute.xlu0 %782
    %784 = vrot.lane.b32.xlu0 %v561, 96
    %v785 = vpop.permute.xlu0 %784
    %786 = vrot.lane.b32.xlu0 %v562, 96
    %v787 = vpop.permute.xlu0 %786
    %788 = vrot.lane.b32.xlu0 %v563, 96
    %v789 = vpop.permute.xlu0 %788
    %790 = vrot.lane.b32.xlu0 %v564, 96
    %v791 = vpop.permute.xlu0 %790
    %792 = vrot.lane.b32.xlu0 %v565, 96
    %v793 = vpop.permute.xlu0 %792
    %794 = vrot.lane.b32.xlu0 %v566, 96
    %v795 = vpop.permute.xlu0 %794
    %796 = vrot.lane.b32.xlu0 %v567, 96
    %v797 = vpop.permute.xlu0 %796
    %798 = vrot.lane.b32.xlu0 %v568, 96
    %v799 = vpop.permute.xlu0 %798
    %800 = vrot.lane.b32.xlu0 %v569, 96
    %v801 = vpop.permute.xlu0 %800
    %802 = vrot.lane.b32.xlu0 %v570, 96
    %v803 = vpop.permute.xlu0 %802
    %804 = vrot.lane.b32.xlu0 %v571, 96
    %v805 = vpop.permute.xlu0 %804
    %838 = vrot.lane.b32.xlu0 %v576, 32
    %v839 = vpop.permute.xlu0 %838
    %840 = vrot.lane.b32.xlu0 %v577, 32
    %v841 = vpop.permute.xlu0 %840
    %842 = vrot.lane.b32.xlu0 %v578, 32
    %v843 = vpop.permute.xlu0 %842
    %844 = vrot.lane.b32.xlu0 %v579, 32
    %v845 = vpop.permute.xlu0 %844
    %846 = vrot.lane.b32.xlu0 %v580, 32
    %v847 = vpop.permute.xlu0 %846
    %848 = vrot.lane.b32.xlu0 %v581, 32
    %v849 = vpop.permute.xlu0 %848
    %850 = vrot.lane.b32.xlu0 %v582, 32
    %v851 = vpop.permute.xlu0 %850
    %852 = vrot.lane.b32.xlu0 %v583, 32
    %v853 = vpop.permute.xlu0 %852
    %854 = vrot.lane.b32.xlu0 %v584, 32
    %v855 = vpop.permute.xlu0 %854
    %856 = vrot.lane.b32.xlu0 %v585, 32
    %v857 = vpop.permute.xlu0 %856
    %858 = vrot.lane.b32.xlu0 %v586, 32
    %v859 = vpop.permute.xlu0 %858
    %860 = vrot.lane.b32.xlu0 %v587, 32
    %v861 = vpop.permute.xlu0 %860
    %862 = vrot.lane.b32.xlu0 %v588, 32
    %v863 = vpop.permute.xlu0 %862
    %864 = vrot.lane.b32.xlu0 %v589, 32
    %v865 = vpop.permute.xlu0 %864
    %866 = vrot.lane.b32.xlu0 %v590, 32
    %v867 = vpop.permute.xlu0 %866
    %868 = vrot.lane.b32.xlu0 %v591, 32
    %v869 = vpop.permute.xlu0 %868
    %902 = vrot.lane.b32.xlu0 %v594, 64
    %v903 = vpop.permute.xlu0 %902
    %904 = vrot.lane.b32.xlu0 %v595, 64
    %v905 = vpop.permute.xlu0 %904
    %906 = vrot.lane.b32.xlu0 %v596, 64
    %v907 = vpop.permute.xlu0 %906
    %908 = vrot.lane.b32.xlu0 %v597, 64
    %v909 = vpop.permute.xlu0 %908
    %910 = vrot.lane.b32.xlu0 %v598, 64
    %v911 = vpop.permute.xlu0 %910
    %912 = vrot.lane.b32.xlu0 %v599, 64
    %v913 = vpop.permute.xlu0 %912
    %914 = vrot.lane.b32.xlu0 %v600, 64
    %v915 = vpop.permute.xlu0 %914
    %916 = vrot.lane.b32.xlu0 %v601, 64
    %v917 = vpop.permute.xlu0 %916
    %918 = vrot.lane.b32.xlu0 %v602, 64
    %v919 = vpop.permute.xlu0 %918
    %920 = vrot.lane.b32.xlu0 %v603, 64
    %v921 = vpop.permute.xlu0 %920
    %922 = vrot.lane.b32.xlu0 %v604, 64
    %v923 = vpop.permute.xlu0 %922
    %924 = vrot.lane.b32.xlu0 %v605, 64
    %v925 = vpop.permute.xlu0 %924
    %926 = vrot.lane.b32.xlu0 %v606, 64
    %v927 = vpop.permute.xlu0 %926
    %928 = vrot.lane.b32.xlu0 %v607, 64
    %v929 = vpop.permute.xlu0 %928
    %930 = vrot.lane.b32.xlu0 %v608, 64
    %v931 = vpop.permute.xlu0 %930
    %932 = vrot.lane.b32.xlu0 %v609, 64
    %v933 = vpop.permute.xlu0 %932
    %954 = vrot.lane.b32.xlu0 %v492, 96
    %v955 = vpop.permute.xlu0 %954
    %956 = vrot.lane.b32.xlu0 %v493, 96
    %v957 = vpop.permute.xlu0 %956
    %958 = vrot.lane.b32.xlu0 %v494, 96
    %v959 = vpop.permute.xlu0 %958
    %960 = vrot.lane.b32.xlu0 %v495, 96
    %v961 = vpop.permute.xlu0 %960
    %962 = vrot.lane.b32.xlu0 %v496, 96
    %v963 = vpop.permute.xlu0 %962
    %964 = vrot.lane.b32.xlu0 %v497, 96
    %v965 = vpop.permute.xlu0 %964
    %966 = vrot.lane.b32.xlu0 %v572, 96
    %v967 = vpop.permute.xlu0 %966
    %968 = vrot.lane.b32.xlu0 %v610, 96
    %v969 = vpop.permute.xlu0 %968
    %970 = vrot.lane.b32.xlu0 %v500, 96
    %v971 = vpop.permute.xlu0 %970
    %972 = vrot.lane.b32.xlu0 %v501, 96
    %v973 = vpop.permute.xlu0 %972
    %974 = vrot.lane.b32.xlu0 %v502, 96
    %v975 = vpop.permute.xlu0 %974
    %976 = vrot.lane.b32.xlu0 %v503, 96
    %v977 = vpop.permute.xlu0 %976
    %978 = vrot.lane.b32.xlu0 %v504, 96
    %v979 = vpop.permute.xlu0 %978
    %980 = vrot.lane.b32.xlu0 %v505, 96
    %v981 = vpop.permute.xlu0 %980
    %982 = vrot.lane.b32.xlu0 %v573, 96
    %v983 = vpop.permute.xlu0 %982
    %984 = vrot.lane.b32.xlu0 %v611, 96
    %v985 = vpop.permute.xlu0 %984
    %v1002 = vsel %vm296, %v474, %v647
    %v1003 = vsel %vm296, %v475, %v649
    %v1004 = vsel %vm296, %v476, %v651
    %v1005 = vsel %vm296, %v477, %v653
    %v1006 = vsel %vm296, %v478, %v655
    %v1007 = vsel %vm296, %v479, %v657
    %v1008 = vsel %vm296, %v480, %v659
    %v1009 = vsel %vm296, %v481, %v661
    %v1010 = vsel %vm296, %v482, %v663
    %v1011 = vsel %vm296, %v483, %v665
    %v1012 = vsel %vm296, %v484, %v667
    %v1013 = vsel %vm296, %v485, %v669
    %v1014 = vsel %vm296, %v486, %v671
    %v1015 = vsel %vm296, %v487, %v673
    %v1016 = vsel %vm296, %v488, %v675
    %v1017 = vsel %vm296, %v489, %v677
    %vm1018 = vcmask 523264
    %v1019 = vsel %vm1018, %v1002, %v711
    %v1020 = vsel %vm1018, %v1003, %v713
    %v1021 = vsel %vm1018, %v1004, %v715
    %v1022 = vsel %vm1018, %v1005, %v717
    %v1023 = vsel %vm1018, %v1006, %v719
    %v1024 = vsel %vm1018, %v1007, %v721
    %v1025 = vsel %vm1018, %v1008, %v723
    %v1026 = vsel %vm1018, %v1009, %v725
    %v1027 = vsel %vm1018, %v1010, %v727
    %v1028 = vsel %vm1018, %v1011, %v729
    %v1029 = vsel %vm1018, %v1012, %v731
    %v1030 = vsel %vm1018, %v1013, %v733
    %v1031 = vsel %vm1018, %v1014, %v735
    %v1032 = vsel %vm1018, %v1015, %v737
    %v1033 = vsel %vm1018, %v1016, %v739
    %v1034 = vsel %vm1018, %v1017, %v741
    %vm1035 = vcmask 785408
    %v1036 = vsel %vm1035, %v1019, %v775
    %v1037 = vsel %vm1035, %v1020, %v777
    %v1038 = vsel %vm1035, %v1021, %v779
    %v1039 = vsel %vm1035, %v1022, %v781
    %v1040 = vsel %vm1035, %v1023, %v783
    %v1041 = vsel %vm1035, %v1024, %v785
    %v1042 = vsel %vm1035, %v1025, %v787
    %v1043 = vsel %vm1035, %v1026, %v789
    %v1044 = vsel %vm1035, %v1027, %v791
    %v1045 = vsel %vm1035, %v1028, %v793
    %v1046 = vsel %vm1035, %v1029, %v795
    %v1047 = vsel %vm1035, %v1030, %v797
    %v1048 = vsel %vm1035, %v1031, %v799
    %v1049 = vsel %vm1035, %v1032, %v801
    %v1050 = vsel %vm1035, %v1033, %v803
    %v1051 = vsel %vm1035, %v1034, %v805
    %v1052 = vsel %vm296, %v491, %v839
    %v1053 = vsel %vm296, %v492, %v841
    %v1054 = vsel %vm296, %v493, %v843
    %v1055 = vsel %vm296, %v494, %v845
    %v1056 = vsel %vm296, %v495, %v847
    %v1057 = vsel %vm296, %v496, %v849
    %v1058 = vsel %vm296, %v497, %v851
    %v1059 = vsel %vm296, %v572, %v853
    %v1060 = vsel %vm296, %v499, %v855
    %v1061 = vsel %vm296, %v500, %v857
    %v1062 = vsel %vm296, %v501, %v859
    %v1063 = vsel %vm296, %v502, %v861
    %v1064 = vsel %vm296, %v503, %v863
    %v1065 = vsel %vm296, %v504, %v865
    %v1066 = vsel %vm296, %v505, %v867
    %v1067 = vsel %vm296, %v573, %v869
    %v1068 = vsel %vm1018, %v1052, %v903
    %v1069 = vsel %vm1018, %v1053, %v905
    %v1070 = vsel %vm1018, %v1054, %v907
    %v1071 = vsel %vm1018, %v1055, %v909
    %v1072 = vsel %vm1018, %v1056, %v911
    %v1073 = vsel %vm1018, %v1057, %v913
    %v1074 = vsel %vm1018, %v1058, %v915
    %v1075 = vsel %vm1018, %v1059, %v917
    %v1076 = vsel %vm1018, %v1060, %v919
    %v1077 = vsel %vm1018, %v1061, %v921
    %v1078 = vsel %vm1018, %v1062, %v923
    %v1079 = vsel %vm1018, %v1063, %v925
    %v1080 = vsel %vm1018, %v1064, %v927
    %v1081 = vsel %vm1018, %v1065, %v929
    %v1082 = vsel %vm1018, %v1066, %v931
    %v1083 = vsel %vm1018, %v1067, %v933
    %v1084 = vsel %vm1035, %v1068, %v955
    %v1085 = vsel %vm1035, %v1069, %v957
    %v1086 = vsel %vm1035, %v1070, %v959
    %v1087 = vsel %vm1035, %v1071, %v961
    %v1088 = vsel %vm1035, %v1072, %v963
    %v1089 = vsel %vm1035, %v1073, %v965
    %v1090 = vsel %vm1035, %v1074, %v967
    %v1091 = vsel %vm1035, %v1075, %v969
    %v1092 = vsel %vm1035, %v1076, %v971
    %v1093 = vsel %vm1035, %v1077, %v973
    %v1094 = vsel %vm1035, %v1078, %v975
    %v1095 = vsel %vm1035, %v1079, %v977
    %v1096 = vsel %vm1035, %v1080, %v979
    %v1097 = vsel %vm1035, %v1081, %v981
    %v1098 = vsel %vm1035, %v1082, %v983
    %v1099 = vsel %vm1035, %v1083, %v985
    %v1100 = vpack.c.bf16 %v1037, %v1036
    %v1101 = vpack.c.bf16 %v1085, %v1084
    %v1102 = vpack.c.bf16 %v615, %v614
    %v1103 = vpack.c.bf16 %v1039, %v1038
    %v1104 = vpack.c.bf16 %v1087, %v1086
    %v1105 = vpack.c.bf16 %v617, %v616
    %v1106 = vpack.c.bf16 %v1041, %v1040
    %v1107 = vpack.c.bf16 %v1089, %v1088
    %v1108 = vpack.c.bf16 %v619, %v618
    %v1109 = vpack.c.bf16 %v1043, %v1042
    %v1110 = vpack.c.bf16 %v1091, %v1090
    %v1111 = vpack.c.bf16 %v621, %v620
    %v1112 = vpack.c.bf16 %v1045, %v1044
    %v1113 = vpack.c.bf16 %v1093, %v1092
    %v1114 = vpack.c.bf16 %v623, %v622
    %v1115 = vpack.c.bf16 %v1047, %v1046
    %v1116 = vpack.c.bf16 %v1095, %v1094
    %v1117 = vpack.c.bf16 %v625, %v624
    %v1118 = vpack.c.bf16 %v1049, %v1048
    %v1119 = vpack.c.bf16 %v1097, %v1096
    %v1120 = vpack.c.bf16 %v627, %v626
    %v1121 = vpack.c.bf16 %v1051, %v1050
    %v1122 = vpack.c.bf16 %v1099, %v1098
    %v1123 = vpack.c.bf16 %v629, %v628
    %v1124 = vld [vmem:[%s4] sm:$0xf]
    %v1125 = vld [vmem:[%s4 + $0x4] sm:$0xf]
    %v1126 = vld [vmem:[%s4 + $0x8] sm:$0xf]
    %v1127 = vld [vmem:[%s4 + $0xc] sm:$0xf]
    %v1128 = vld [vmem:[%s4 + $0x10] sm:$0xf]
    %v1129 = vld [vmem:[%s4 + $0x14] sm:$0xf]
    %v1130 = vld [vmem:[%s4 + $0x18] sm:$0xf]
    %v1131 = vld [vmem:[%s4 + $0x1c] sm:$0xf]
    %v1132 = vld [vmem:[%s4 + $0x20] sm:$0xf]
    %v1133 = vld [vmem:[%s4 + $0x24] sm:$0xf]
    %v1134 = vld [vmem:[%s4 + $0x28] sm:$0xf]
    %v1135 = vld [vmem:[%s4 + $0x2c] sm:$0xf]
    %v1136 = vld [vmem:[%s4 + $0x30] sm:$0xf]
    %v1137 = vld [vmem:[%s4 + $0x34] sm:$0xf]
    %v1138 = vld [vmem:[%s4 + $0x38] sm:$0xf]
    %v1139 = vld [vmem:[%s4 + $0x3c] sm:$0xf]
    %v1140 = vld [vmem:[%s4 + $0x40] sm:$0xf]
    %v1141 = vld [vmem:[%s4 + $0x44] sm:$0xf]
    %v1142 = vld [vmem:[%s4 + $0x48] sm:$0xf]
    %v1143 = vld [vmem:[%s4 + $0x4c] sm:$0xf]
    %v1144 = vld [vmem:[%s4 + $0x50] sm:$0xf]
    %v1145 = vld [vmem:[%s4 + $0x54] sm:$0xf]
    %v1146 = vld [vmem:[%s4 + $0x58] sm:$0xf]
    %v1147 = vld [vmem:[%s4 + $0x5c] sm:$0xf]
    %v1148 = vld [vmem:[%s4 + $0x60] sm:$0xf]
    %v1149 = vld [vmem:[%s4 + $0x64] sm:$0xf]
    %v1150 = vld [vmem:[%s4 + $0x68] sm:$0xf]
    %v1151 = vld [vmem:[%s4 + $0x6c] sm:$0xf]
    %v1152 = vld [vmem:[%s4 + $0x70] sm:$0xf]
    %v1153 = vld [vmem:[%s4 + $0x74] sm:$0xf]
    %v1154 = vld [vmem:[%s4 + $0x78] sm:$0xf]
    %v1155 = vld [vmem:[%s4 + $0x7c] sm:$0xf]
    %v1156 = vld [vmem:[%s4 + $0x80] sm:$0xf]
    %v1157 = vld [vmem:[%s4 + $0x84] sm:$0xf]
    %v1158 = vld [vmem:[%s4 + $0x88] sm:$0xf]
    %v1159 = vld [vmem:[%s4 + $0x8c] sm:$0xf]
    %v1196 = vunpack.c.l.b16 %v1124
    %v1197 = vunpack.c.l.b16 %v1125
    %v1198 = vunpack.c.l.b16 %v1126
    %v1199 = vunpack.c.l.b16 %v1127
    %v1200 = vunpack.c.l.b16 %v1128
    %v1201 = vunpack.c.l.b16 %v1129
    %v1202 = vunpack.c.l.b16 %v1130
    %v1203 = vunpack.c.l.b16 %v1131
    %v1204 = vunpack.c.l.b16 %v1132
    %v1205 = vunpack.c.l.b16 %v1133
    %v1206 = vunpack.c.l.b16 %v1134
    %v1207 = vunpack.c.l.b16 %v1135
    %v1208 = vunpack.c.l.b16 %v1136
    %v1209 = vunpack.c.l.b16 %v1137
    %v1210 = vunpack.c.l.b16 %v1138
    %v1211 = vunpack.c.l.b16 %v1139
    %v1212 = vunpack.c.l.b16 %v1140
    %v1213 = vunpack.c.l.b16 %v1141
    %v1214 = vunpack.c.l.b16 %v1142
    %v1215 = vunpack.c.l.b16 %v1143
    %v1216 = vunpack.c.l.b16 %v1144
    %v1217 = vunpack.c.l.b16 %v1145
    %v1218 = vunpack.c.l.b16 %v1146
    %v1219 = vunpack.c.l.b16 %v1147
    %v1220 = vunpack.c.l.b16 %v1148
    %v1221 = vunpack.c.l.b16 %v1149
    %v1222 = vunpack.c.l.b16 %v1150
    %v1223 = vunpack.c.l.b16 %v1151
    %v1224 = vunpack.c.l.b16 %v1152
    %v1225 = vunpack.c.l.b16 %v1153
    %v1226 = vunpack.c.l.b16 %v1154
    %v1227 = vunpack.c.l.b16 %v1155
    %v1228 = vunpack.c.l.b16 %v1156
    %v1229 = vunpack.c.l.b16 %v1157
    %v1230 = vunpack.c.l.b16 %v1158
    %v1231 = vunpack.c.l.b16 %v1159
    %v1232 = vpack.c.b16 %v1197, %v1196
    %v1233 = vpack.c.b16 %v1199, %v1198
    %v1234 = vpack.c.b16 %v1201, %v1200
    %v1235 = vpack.c.b16 %v1203, %v1202
    %v1236 = vpack.c.b16 %v1205, %v1204
    %v1237 = vpack.c.b16 %v1207, %v1206
    %v1238 = vpack.c.b16 %v1209, %v1208
    %v1239 = vpack.c.b16 %v1211, %v1210
    %v1240 = vpack.c.b16 %v1213, %v1212
    %v1241 = vpack.c.b16 %v1215, %v1214
    %v1242 = vpack.c.b16 %v1217, %v1216
    %v1243 = vpack.c.b16 %v1219, %v1218
    %v1244 = vpack.c.b16 %v1221, %v1220
    %v1245 = vpack.c.b16 %v1223, %v1222
    %v1246 = vpack.c.b16 %v1225, %v1224
    %v1247 = vpack.c.b16 %v1227, %v1226
    %v1248 = vpack.c.b16 %v1229, %v1228
    %v1249 = vpack.c.b16 %v1231, %v1230
    %v1269 = vsel %vm296, %v1102, 0
    %v1272 = vsel %vm296, %v1105, 0
    %v1275 = vsel %vm296, %v1108, 0
    %v1278 = vsel %vm296, %v1111, 0
    %v1281 = vsel %vm296, %v1114, 0
    %v1284 = vsel %vm296, %v1117, 0
    %v1287 = vsel %vm296, %v1120, 0
    %v1290 = vsel %vm296, %v1123, 0
    %1292 = vmatprep.subr.bf16.mxu0 0
    %1293 = vmatpush1.bf16.msra.mxu0 %v1232
    %1294 = vmatprep.subr.bf16.mxu0 0
    %1295 = vmatpush1.bf16.msra.mxu0 %v1233
    %1296 = vmatprep.subr.bf16.mxu0 0
    %1297 = vmatpush1.bf16.msra.mxu0 %v1234
    %1298 = vmatprep.subr.bf16.mxu0 0
    %1299 = vmatpush1.bf16.msra.mxu0 %v1235
    %1300 = vmatprep.subr.bf16.mxu0 0
    %1301 = vmatpush1.bf16.msra.mxu0 %v1236
    %1302 = vmatprep.subr.bf16.mxu0 0
    %1303 = vmatpush1.bf16.msra.mxu0 %v1237
    %1304 = vmatprep.subr.bf16.mxu0 0
    %1305 = vmatpush1.bf16.msra.mxu0 %v1238
    %1306 = vmatprep.subr.bf16.mxu0 0
    %1307 = vmatpush1.bf16.msra.mxu0 %v1239
    %1308 = vmatprep.subr.bf16.mxu0 0
    %1309 = vmatpush1.bf16.msra.mxu0 %v1240
    %1310 = vmatprep.subr.bf16.mxu0 0
    %1311 = vmatpush1.bf16.msra.mxu0 %v1241
    %1312 = vmatprep.subr.bf16.mxu0 0
    %1313 = vmatpush1.bf16.msra.mxu0 %v1242
    %1314 = vmatprep.subr.bf16.mxu0 0
    %1315 = vmatpush1.bf16.msra.mxu0 %v1243
    %1316 = vmatprep.subr.bf16.mxu0 0
    %1317 = vmatpush1.bf16.msra.mxu0 %v1244
    %1318 = vmatprep.subr.bf16.mxu0 0
    %1319 = vmatpush1.bf16.msra.mxu0 %v1245
    %1320 = vmatprep.subr.bf16.mxu0 0
    %1321 = vmatpush1.bf16.msra.mxu0 %v1246
    %1322 = vmatprep.subr.bf16.mxu0 0
    %1323 = vmatpush1.bf16.msra.mxu0 %v1247
    %1324 = vmatprep.mubr.bf16.mxu0 %v1101
    %1325 = vmatmul.mubr.bf16.gmra.mrb[0].mxu0 %v1100
    %v1326 = vpop.f32.mrb[0].mxu0
    %v1327 = vadd.f32 0.0, %v1326
    %v1328 = vpop.f32.mrb[0].mxu0
    %v1329 = vpop.f32.mrb[0].mxu0
    %v1330 = vadd.f32 0.0, %v1329
    %v1331 = vpop.f32.mrb[0].mxu0
    %1332 = vmatprep.mubr.bf16.mxu0 %v1104
    %1333 = vmatmul.mubr.bf16.gmra.mrb[0].mxu0 %v1103
    %v1334 = vpop.f32.mrb[0].mxu0
    %v1335 = vadd.f32 0.0, %v1334
    %v1336 = vpop.f32.mrb[0].mxu0
    %v1337 = vpop.f32.mrb[0].mxu0
    %v1338 = vadd.f32 0.0, %v1337
    %v1339 = vpop.f32.mrb[0].mxu0
    %1340 = vmatprep.mubr.bf16.mxu0 %v1107
    %1341 = vmatmul.mubr.bf16.gmra.mrb[0].mxu0 %v1106
    %v1342 = vpop.f32.mrb[0].mxu0
    %v1343 = vadd.f32 0.0, %v1342
    %v1344 = vpop.f32.mrb[0].mxu0
    %v1345 = vpop.f32.mrb[0].mxu0
    %v1346 = vadd.f32 0.0, %v1345
    %v1347 = vpop.f32.mrb[0].mxu0
    %1348 = vmatprep.mubr.bf16.mxu0 %v1110
    %1349 = vmatmul.mubr.bf16.gmra.mrb[0].mxu0 %v1109
    %v1350 = vpop.f32.mrb[0].mxu0
    %v1351 = vadd.f32 0.0, %v1350
    %v1352 = vpop.f32.mrb[0].mxu0
    %v1353 = vpop.f32.mrb[0].mxu0
    %v1354 = vadd.f32 0.0, %v1353
    %v1355 = vpop.f32.mrb[0].mxu0
    %1356 = vmatprep.mubr.bf16.mxu0 %v1113
    %1357 = vmatmul.mubr.bf16.gmra.mrb[0].mxu0 %v1112
    %v1358 = vpop.f32.mrb[0].mxu0
    %v1359 = vadd.f32 0.0, %v1358
    %v1360 = vpop.f32.mrb[0].mxu0
    %v1361 = vpop.f32.mrb[0].mxu0
    %v1362 = vadd.f32 0.0, %v1361
    %v1363 = vpop.f32.mrb[0].mxu0
    %1364 = vmatprep.mubr.bf16.mxu0 %v1116
    %1365 = vmatmul.mubr.bf16.gmra.mrb[0].mxu0 %v1115
    %v1366 = vpop.f32.mrb[0].mxu0
    %v1367 = vadd.f32 0.0, %v1366
    %v1368 = vpop.f32.mrb[0].mxu0
    %v1369 = vpop.f32.mrb[0].mxu0
    %v1370 = vadd.f32 0.0, %v1369
    %v1371 = vpop.f32.mrb[0].mxu0
    %1372 = vmatprep.mubr.bf16.mxu0 %v1119
    %1373 = vmatmul.mubr.bf16.gmra.mrb[0].mxu0 %v1118
    %v1374 = vpop.f32.mrb[0].mxu0
    %v1375 = vadd.f32 0.0, %v1374
    %v1376 = vpop.f32.mrb[0].mxu0
    %v1377 = vpop.f32.mrb[0].mxu0
    %v1378 = vadd.f32 0.0, %v1377
    %v1379 = vpop.f32.mrb[0].mxu0
    %1380 = vmatprep.mubr.bf16.mxu0 %v1122
    %1381 = vmatmul.mubr.bf16.gmra.mrb[0].mxu0 %v1121
    %v1382 = vpop.f32.mrb[0].mxu0
    %v1383 = vadd.f32 0.0, %v1382
    %v1384 = vpop.f32.mrb[0].mxu0
    %v1385 = vpop.f32.mrb[0].mxu0
    %v1386 = vadd.f32 0.0, %v1385
    %v1387 = vpop.f32.mrb[0].mxu0
    %1388 = vdwg.mxu0
    %1389 = vmatprep.subr.bf16.mxu0 0
    %1390 = vmatpush1.bf16.msra.mxu0 %v1248
    %1391 = vmatprep.subr.bf16.mxu0 0
    %1392 = vmatpush1.bf16.msra.mxu0 %v1249
    %1393 = vmatprep.subr.bf16.mxu0 0
    %1394 = vmatpush1.bf16.msra.mxu0 0
    %1395 = vmatprep.subr.bf16.mxu0 0
    %1396 = vmatpush1.bf16.msra.mxu0 0
    %1397 = vmatprep.subr.bf16.mxu0 0
    %1398 = vmatpush1.bf16.msra.mxu0 0
    %1399 = vmatprep.subr.bf16.mxu0 0
    %1400 = vmatpush1.bf16.msra.mxu0 0
    %1401 = vmatprep.subr.bf16.mxu0 0
    %1402 = vmatpush1.bf16.msra.mxu0 0
    %1403 = vmatprep.subr.bf16.mxu0 0
    %1404 = vmatpush1.bf16.msra.mxu0 0
    %1405 = vmatprep.subr.bf16.mxu0 0
    %1406 = vmatpush1.bf16.msra.mxu0 0
    %1407 = vmatprep.subr.bf16.mxu0 0
    %1408 = vmatpush1.bf16.msra.mxu0 0
    %1409 = vmatprep.subr.bf16.mxu0 0
    %1410 = vmatpush1.bf16.msra.mxu0 0
    %1411 = vmatprep.subr.bf16.mxu0 0
    %1412 = vmatpush1.bf16.msra.mxu0 0
    %1413 = vmatprep.subr.bf16.mxu0 0
    %1414 = vmatpush1.bf16.msra.mxu0 0
    %1415 = vmatprep.subr.bf16.mxu0 0
    %1416 = vmatpush1.bf16.msra.mxu0 0
    %1417 = vmatprep.subr.bf16.mxu0 0
    %1418 = vmatpush1.bf16.msra.mxu0 0
    %1419 = vmatprep.subr.bf16.mxu0 0
    %1420 = vmatpush1.bf16.msra.mxu0 0
    %1421 = vmatprep.mubr.bf16.mxu0 0
    %1422 = vmatmul.mubr.bf16.gmra.mrb[0].mxu0 %v1269
    %v1423 = vpop.f32.mrb[0].mxu0
    %v1424 = vadd.f32 %v1327, %v1423
    %v1425 = vpop.f32.mrb[0].mxu0
    %v1426 = vpop.f32.mrb[0].mxu0
    %v1427 = vadd.f32 %v1330, %v1426
    %v1428 = vpop.f32.mrb[0].mxu0
    %1429 = vmatprep.mubr.bf16.mxu0 0
    %1430 = vmatmul.mubr.bf16.gmra.mrb[0].mxu0 %v1272
    %v1431 = vpop.f32.mrb[0].mxu0
    %v1432 = vadd.f32 %v1335, %v1431
    %v1433 = vpop.f32.mrb[0].mxu0
    %v1434 = vpop.f32.mrb[0].mxu0
    %v1435 = vadd.f32 %v1338, %v1434
    %v1436 = vpop.f32.mrb[0].mxu0
    %1437 = vmatprep.mubr.bf16.mxu0 0
    %1438 = vmatmul.mubr.bf16.gmra.mrb[0].mxu0 %v1275
    %v1439 = vpop.f32.mrb[0].mxu0
    %v1440 = vadd.f32 %v1343, %v1439
    %v1441 = vpop.f32.mrb[0].mxu0
    %v1442 = vpop.f32.mrb[0].mxu0
    %v1443 = vadd.f32 %v1346, %v1442
    %v1444 = vpop.f32.mrb[0].mxu0
    %1445 = vmatprep.mubr.bf16.mxu0 0
    %1446 = vmatmul.mubr.bf16.gmra.mrb[0].mxu0 %v1278
    %v1447 = vpop.f32.mrb[0].mxu0
    %v1448 = vadd.f32 %v1351, %v1447
    %v1449 = vpop.f32.mrb[0].mxu0
    %v1450 = vpop.f32.mrb[0].mxu0
    %v1451 = vadd.f32 %v1354, %v1450
    %v1452 = vpop.f32.mrb[0].mxu0
    %1453 = vmatprep.mubr.bf16.mxu0 0
    %1454 = vmatmul.mubr.bf16.gmra.mrb[0].mxu0 %v1281
    %v1455 = vpop.f32.mrb[0].mxu0
    %v1456 = vadd.f32 %v1359, %v1455
    %v1457 = vpop.f32.mrb[0].mxu0
    %v1458 = vpop.f32.mrb[0].mxu0
    %v1459 = vadd.f32 %v1362, %v1458
    %v1460 = vpop.f32.mrb[0].mxu0
    %1461 = vmatprep.mubr.bf16.mxu0 0
    %1462 = vmatmul.mubr.bf16.gmra.mrb[0].mxu0 %v1284
    %v1463 = vpop.f32.mrb[0].mxu0
    %v1464 = vadd.f32 %v1367, %v1463
    %v1465 = vpop.f32.mrb[0].mxu0
    %v1466 = vpop.f32.mrb[0].mxu0
    %v1467 = vadd.f32 %v1370, %v1466
    %v1468 = vpop.f32.mrb[0].mxu0
    %1469 = vmatprep.mubr.bf16.mxu0 0
    %1470 = vmatmul.mubr.bf16.gmra.mrb[0].mxu0 %v1287
    %v1471 = vpop.f32.mrb[0].mxu0
    %v1472 = vadd.f32 %v1375, %v1471
    %v1473 = vpop.f32.mrb[0].mxu0
    %v1474 = vpop.f32.mrb[0].mxu0
    %v1475 = vadd.f32 %v1378, %v1474
    %v1476 = vpop.f32.mrb[0].mxu0
    %1477 = vmatprep.mubr.bf16.mxu0 0
    %1478 = vmatmul.mubr.bf16.gmra.mrb[0].mxu0 %v1290
    %v1479 = vpop.f32.mrb[0].mxu0
    %v1480 = vadd.f32 %v1383, %v1479
    %v1481 = vpop.f32.mrb[0].mxu0
    %v1482 = vpop.f32.mrb[0].mxu0
    %v1483 = vadd.f32 %v1386, %v1482
    %v1484 = vpop.f32.mrb[0].mxu0
    %1485 = vdwg.mxu0
    %v1486 = vld [vmem:[%s5] sm:$0x1]
    %v1488 = vlaneseq
    %v1489 = vshrl.u32 %v1488, 7
    %v1490 = vsub.s32 0, %v1489
    %v1491 = vrot.slane %v1486, %v1490
    %v1493 = vmul.f32 %v1424, %v1491
    %v1494 = vmul.f32 %v1427, %v1491
    %v1495 = vmul.f32 %v1432, %v1491
    %v1496 = vmul.f32 %v1435, %v1491
    %v1497 = vmul.f32 %v1440, %v1491
    %v1498 = vmul.f32 %v1443, %v1491
    %v1499 = vmul.f32 %v1448, %v1491
    %v1500 = vmul.f32 %v1451, %v1491
    %v1501 = vmul.f32 %v1456, %v1491
    %v1502 = vmul.f32 %v1459, %v1491
    %v1503 = vmul.f32 %v1464, %v1491
    %v1504 = vmul.f32 %v1467, %v1491
    %v1505 = vmul.f32 %v1472, %v1491
    %v1506 = vmul.f32 %v1475, %v1491
    %v1507 = vmul.f32 %v1480, %v1491
    %v1508 = vmul.f32 %v1483, %v1491
    %v1509 = vld [vmem:[%s6] sm:$0x1]
    %v1511 = vlaneseq
    %v1512 = vshrl.u32 %v1511, 7
    %v1513 = vsub.s32 0, %v1512
    %v1514 = vrot.slane %v1509, %v1513
    %v1516 = vadd.f32 %v1493, %v1514
    %v1517 = vadd.f32 %v1494, %v1514
    %v1518 = vadd.f32 %v1495, %v1514
    %v1519 = vadd.f32 %v1496, %v1514
    %v1520 = vadd.f32 %v1497, %v1514
    %v1521 = vadd.f32 %v1498, %v1514
    %v1522 = vadd.f32 %v1499, %v1514
    %v1523 = vadd.f32 %v1500, %v1514
    %v1524 = vadd.f32 %v1501, %v1514
    %v1525 = vadd.f32 %v1502, %v1514
    %v1526 = vadd.f32 %v1503, %v1514
    %v1527 = vadd.f32 %v1504, %v1514
    %v1528 = vadd.f32 %v1505, %v1514
    %v1529 = vadd.f32 %v1506, %v1514
    %v1530 = vadd.f32 %v1507, %v1514
    %v1531 = vadd.f32 %v1508, %v1514
    %v1532 = vmax.f32 %v1516, 0.0
    %v1533 = vmax.f32 %v1517, 0.0
    %v1534 = vmax.f32 %v1518, 0.0
    %v1535 = vmax.f32 %v1519, 0.0
    %v1536 = vmax.f32 %v1520, 0.0
    %v1537 = vmax.f32 %v1521, 0.0
    %v1538 = vmax.f32 %v1522, 0.0
    %v1539 = vmax.f32 %v1523, 0.0
    %v1540 = vmax.f32 %v1524, 0.0
    %v1541 = vmax.f32 %v1525, 0.0
    %v1542 = vmax.f32 %v1526, 0.0
    %v1543 = vmax.f32 %v1527, 0.0
    %v1544 = vmax.f32 %v1528, 0.0
    %v1545 = vmax.f32 %v1529, 0.0
    %v1546 = vmax.f32 %v1530, 0.0
    %v1547 = vmax.f32 %v1531, 0.0
    %v1548 = vpack.c.bf16 %v1533, %v1532
    %v1549 = vpack.c.bf16 %v1535, %v1534
    %v1550 = vpack.c.bf16 %v1537, %v1536
    %v1551 = vpack.c.bf16 %v1539, %v1538
    %v1552 = vpack.c.bf16 %v1541, %v1540
    %v1553 = vpack.c.bf16 %v1543, %v1542
    %v1554 = vpack.c.bf16 %v1545, %v1544
    %v1555 = vpack.c.bf16 %v1547, %v1546
    %v1556 = vld [vmem:[%s7] sm:$0xf]
    %v1557 = vld [vmem:[%s7 + $0x4] sm:$0xf]
    %v1558 = vld [vmem:[%s7 + $0x8] sm:$0xf]
    %v1559 = vld [vmem:[%s7 + $0xc] sm:$0xf]
    %v1564 = vunpack.c.l.b16 %v1556
    %v1565 = vunpack.c.l.b16 %v1557
    %v1566 = vunpack.c.l.b16 %v1558
    %v1567 = vunpack.c.l.b16 %v1559
    %v1568 = vpack.c.b16 %v1565, %v1564
    %v1569 = vpack.c.b16 %v1567, %v1566
    %v1573 = vsel %vm296, %v1548, 0
    %v1576 = vsel %vm296, %v1549, 0
    %v1579 = vsel %vm296, %v1550, 0
    %v1582 = vsel %vm296, %v1551, 0
    %v1585 = vsel %vm296, %v1552, 0
    %v1588 = vsel %vm296, %v1553, 0
    %v1591 = vsel %vm296, %v1554, 0
    %v1594 = vsel %vm296, %v1555, 0
    %1596 = vmatprep.subr.bf16.mxu0 0
    %1597 = vmatpush1.bf16.msra.mxu0 %v1568
    %1598 = vmatprep.subr.bf16.mxu0 0
    %1599 = vmatpush1.bf16.msra.mxu0 %v1569
    %1600 = vmatprep.subr.bf16.mxu0 0
    %1601 = vmatpush1.bf16.msra.mxu0 0
    %1602 = vmatprep.subr.bf16.mxu0 0
    %1603 = vmatpush1.bf16.msra.mxu0 0
    %1604 = vmatprep.subr.bf16.mxu0 0
    %1605 = vmatpush1.bf16.msra.mxu0 0
    %1606 = vmatprep.subr.bf16.mxu0 0
    %1607 = vmatpush1.bf16.msra.mxu0 0
    %1608 = vmatprep.subr.bf16.mxu0 0
    %1609 = vmatpush1.bf16.msra.mxu0 0
    %1610 = vmatprep.subr.bf16.mxu0 0
    %1611 = vmatpush1.bf16.msra.mxu0 0
    %1612 = vmatprep.subr.bf16.mxu0 0
    %1613 = vmatpush1.bf16.msra.mxu0 0
    %1614 = vmatprep.subr.bf16.mxu0 0
    %1615 = vmatpush1.bf16.msra.mxu0 0
    %1616 = vmatprep.subr.bf16.mxu0 0
    %1617 = vmatpush1.bf16.msra.mxu0 0
    %1618 = vmatprep.subr.bf16.mxu0 0
    %1619 = vmatpush1.bf16.msra.mxu0 0
    %1620 = vmatprep.subr.bf16.mxu0 0
    %1621 = vmatpush1.bf16.msra.mxu0 0
    %1622 = vmatprep.subr.bf16.mxu0 0
    %1623 = vmatpush1.bf16.msra.mxu0 0
    %1624 = vmatprep.subr.bf16.mxu0 0
    %1625 = vmatpush1.bf16.msra.mxu0 0
    %1626 = vmatprep.subr.bf16.mxu0 0
    %1627 = vmatpush1.bf16.msra.mxu0 0
    %1628 = vmatprep.mubr.bf16.mxu0 0
    %1629 = vmatmul.mubr.bf16.gmra.mrb[0].mxu0 %v1573
    %v1630 = vpop.f32.mrb[0].mxu0
    %v1631 = vadd.f32 0.0, %v1630
    %v1632 = vpop.f32.mrb[0].mxu0
    %v1633 = vpop.f32.mrb[0].mxu0
    %v1634 = vadd.f32 0.0, %v1633
    %v1635 = vpop.f32.mrb[0].mxu0
    %1636 = vmatprep.mubr.bf16.mxu0 0
    %1637 = vmatmul.mubr.bf16.gmra.mrb[0].mxu0 %v1576
    %v1638 = vpop.f32.mrb[0].mxu0
    %v1639 = vadd.f32 0.0, %v1638
    %v1640 = vpop.f32.mrb[0].mxu0
    %v1641 = vpop.f32.mrb[0].mxu0
    %v1642 = vadd.f32 0.0, %v1641
    %v1643 = vpop.f32.mrb[0].mxu0
    %1644 = vmatprep.mubr.bf16.mxu0 0
    %1645 = vmatmul.mubr.bf16.gmra.mrb[0].mxu0 %v1579
    %v1646 = vpop.f32.mrb[0].mxu0
    %v1647 = vadd.f32 0.0, %v1646
    %v1648 = vpop.f32.mrb[0].mxu0
    %v1649 = vpop.f32.mrb[0].mxu0
    %v1650 = vadd.f32 0.0, %v1649
    %v1651 = vpop.f32.mrb[0].mxu0
    %1652 = vmatprep.mubr.bf16.mxu0 0
    %1653 = vmatmul.mubr.bf16.gmra.mrb[0].mxu0 %v1582
    %v1654 = vpop.f32.mrb[0].mxu0
    %v1655 = vadd.f32 0.0, %v1654
    %v1656 = vpop.f32.mrb[0].mxu0
    %v1657 = vpop.f32.mrb[0].mxu0
    %v1658 = vadd.f32 0.0, %v1657
    %v1659 = vpop.f32.mrb[0].mxu0
    %1660 = vmatprep.mubr.bf16.mxu0 0
    %1661 = vmatmul.mubr.bf16.gmra.mrb[0].mxu0 %v1585
    %v1662 = vpop.f32.mrb[0].mxu0
    %v1663 = vadd.f32 0.0, %v1662
    %v1664 = vpop.f32.mrb[0].mxu0
    %v1665 = vpop.f32.mrb[0].mxu0
    %v1666 = vadd.f32 0.0, %v1665
    %v1667 = vpop.f32.mrb[0].mxu0
    %1668 = vmatprep.mubr.bf16.mxu0 0
    %1669 = vmatmul.mubr.bf16.gmra.mrb[0].mxu0 %v1588
    %v1670 = vpop.f32.mrb[0].mxu0
    %v1671 = vadd.f32 0.0, %v1670
    %v1672 = vpop.f32.mrb[0].mxu0
    %v1673 = vpop.f32.mrb[0].mxu0
    %v1674 = vadd.f32 0.0, %v1673
    %v1675 = vpop.f32.mrb[0].mxu0
    %1676 = vmatprep.mubr.bf16.mxu0 0
    %1677 = vmatmul.mubr.bf16.gmra.mrb[0].mxu0 %v1591
    %v1678 = vpop.f32.mrb[0].mxu0
    %v1679 = vadd.f32 0.0, %v1678
    %v1680 = vpop.f32.mrb[0].mxu0
    %v1681 = vpop.f32.mrb[0].mxu0
    %v1682 = vadd.f32 0.0, %v1681
    %v1683 = vpop.f32.mrb[0].mxu0
    %1684 = vmatprep.mubr.bf16.mxu0 0
    %1685 = vmatmul.mubr.bf16.gmra.mrb[0].mxu0 %v1594
    %v1686 = vpop.f32.mrb[0].mxu0
    %v1687 = vadd.f32 0.0, %v1686
    %v1688 = vpop.f32.mrb[0].mxu0
    %v1689 = vpop.f32.mrb[0].mxu0
    %v1690 = vadd.f32 0.0, %v1689
    %v1691 = vpop.f32.mrb[0].mxu0
    %1692 = vdwg.mxu0
    %v1693 = vld [vmem:[%s8] sm:$0x1]
    %v1695 = vlaneseq
    %v1696 = vshrl.u32 %v1695, 7
    %v1697 = vsub.s32 0, %v1696
    %v1698 = vrot.slane %v1693, %v1697
    %v1700 = vmul.f32 %v1631, %v1698
    %v1701 = vmul.f32 %v1634, %v1698
    %v1702 = vmul.f32 %v1639, %v1698
    %v1703 = vmul.f32 %v1642, %v1698
    %v1704 = vmul.f32 %v1647, %v1698
    %v1705 = vmul.f32 %v1650, %v1698
    %v1706 = vmul.f32 %v1655, %v1698
    %v1707 = vmul.f32 %v1658, %v1698
    %v1708 = vmul.f32 %v1663, %v1698
    %v1709 = vmul.f32 %v1666, %v1698
    %v1710 = vmul.f32 %v1671, %v1698
    %v1711 = vmul.f32 %v1674, %v1698
    %v1712 = vmul.f32 %v1679, %v1698
    %v1713 = vmul.f32 %v1682, %v1698
    %v1714 = vmul.f32 %v1687, %v1698
    %v1715 = vmul.f32 %v1690, %v1698
    %v1716 = vld [vmem:[%s9] sm:$0x1]
    %v1718 = vlaneseq
    %v1719 = vshrl.u32 %v1718, 7
    %v1720 = vsub.s32 0, %v1719
    %v1721 = vrot.slane %v1716, %v1720
    %v1723 = vadd.f32 %v1700, %v1721
    %v1724 = vadd.f32 %v1701, %v1721
    %v1725 = vadd.f32 %v1702, %v1721
    %v1726 = vadd.f32 %v1703, %v1721
    %v1727 = vadd.f32 %v1704, %v1721
    %v1728 = vadd.f32 %v1705, %v1721
    %v1729 = vadd.f32 %v1706, %v1721
    %v1730 = vadd.f32 %v1707, %v1721
    %v1731 = vadd.f32 %v1708, %v1721
    %v1732 = vadd.f32 %v1709, %v1721
    %v1733 = vadd.f32 %v1710, %v1721
    %v1734 = vadd.f32 %v1711, %v1721
    %v1735 = vadd.f32 %v1712, %v1721
    %v1736 = vadd.f32 %v1713, %v1721
    %v1737 = vadd.f32 %v1714, %v1721
    %v1738 = vadd.f32 %v1715, %v1721
    %v1739 = vadd.f32 %v1723, %v1724
    %v1740 = vadd.f32 %v1739, %v1725
    %v1741 = vadd.f32 %v1740, %v1726
    %v1742 = vadd.f32 %v1741, %v1727
    %v1743 = vadd.f32 %v1742, %v1728
    %v1744 = vadd.f32 %v1743, %v1729
    %v1745 = vadd.f32 %v1744, %v1730
    %v1746 = vrot.slane %v1745, 4
    %v1747 = vadd.f32 %v1745, %v1746
    %v1748 = vrot.slane %v1747, 2
    %v1749 = vadd.f32 %v1747, %v1748
    %v1750 = vrot.slane %v1749, 1
    %v1751 = vadd.f32 %v1749, %v1750
    %v1752 = vadd.f32 %v1731, %v1732
    %v1753 = vadd.f32 %v1752, %v1733
    %v1754 = vadd.f32 %v1753, %v1734
    %v1755 = vadd.f32 %v1754, %v1735
    %v1756 = vadd.f32 %v1755, %v1736
    %v1757 = vadd.f32 %v1756, %v1737
    %v1758 = vadd.f32 %v1757, %v1738
    %v1759 = vrot.slane %v1758, 4
    %v1760 = vadd.f32 %v1758, %v1759
    %v1761 = vrot.slane %v1760, 2
    %v1762 = vadd.f32 %v1760, %v1761
    %v1763 = vrot.slane %v1762, 1
    %v1764 = vadd.f32 %v1762, %v1763
    %v1765 = vmul.f32 %v1751, 0.015625
    %v1766 = vmul.f32 %v1764, 0.015625
    %v1767 = vpack.c.bf16 %v1765, %v1765
    %v1768 = vpack.c.bf16 %v1766, %v1766
    %v1769 = vld [vmem:[%s10] sm:$0xf]
    %v1770 = vld [vmem:[%s10 + $0x4] sm:$0xf]
    %v1771 = vld [vmem:[%s10 + $0x8] sm:$0xf]
    %v1772 = vld [vmem:[%s10 + $0xc] sm:$0xf]
    %v1773 = vld [vmem:[%s10 + $0x10] sm:$0xf]
    %v1774 = vld [vmem:[%s10 + $0x14] sm:$0xf]
    %v1775 = vld [vmem:[%s10 + $0x18] sm:$0xf]
    %v1776 = vld [vmem:[%s10 + $0x1c] sm:$0xf]
    %v1777 = vld [vmem:[%s10 + $0x20] sm:$0xf]
    %v1778 = vld [vmem:[%s10 + $0x24] sm:$0xf]
    %v1779 = vld [vmem:[%s10 + $0x28] sm:$0xf]
    %v1780 = vld [vmem:[%s10 + $0x2c] sm:$0xf]
    %v1781 = vld [vmem:[%s10 + $0x30] sm:$0xf]
    %v1782 = vld [vmem:[%s10 + $0x34] sm:$0xf]
    %v1783 = vld [vmem:[%s10 + $0x38] sm:$0xf]
    %v1784 = vld [vmem:[%s10 + $0x3c] sm:$0xf]
    %v1785 = vld [vmem:[%s11] sm:$0x1]
    %v1787 = vlaneseq
    %v1788 = vshrl.u32 %v1787, 7
    %v1789 = vsub.s32 0, %v1788
    %v1790 = vrot.slane %v1785, %v1789
    %v1794 = vunpack.c.l.b16 %v1767
    %v1795 = vunpack.c.l.b16 %v1768
    %vm1796 = vcmask 1041409
    %v1797 = vsel %vm1796, %v1795, %v1794
    %v1798 = vpack.c.b16 %v1797, %v1797
    %v1816 = vunpack.c.l.b16 %v1769
    %v1817 = vunpack.c.l.b16 %v1770
    %v1818 = vunpack.c.l.b16 %v1771
    %v1819 = vunpack.c.l.b16 %v1772
    %v1820 = vunpack.c.l.b16 %v1773
    %v1821 = vunpack.c.l.b16 %v1774
    %v1822 = vunpack.c.l.b16 %v1775
    %v1823 = vunpack.c.l.b16 %v1776
    %v1824 = vunpack.c.l.b16 %v1777
    %v1825 = vunpack.c.l.b16 %v1778
    %v1826 = vunpack.c.l.b16 %v1779
    %v1827 = vunpack.c.l.b16 %v1780
    %v1828 = vunpack.c.l.b16 %v1781
    %v1829 = vunpack.c.l.b16 %v1782
    %v1830 = vunpack.c.l.b16 %v1783
    %v1831 = vunpack.c.l.b16 %v1784
    %v1832 = vpack.c.b16 %v1817, %v1816
    %v1833 = vpack.c.b16 %v1819, %v1818
    %v1834 = vpack.c.b16 %v1821, %v1820
    %v1835 = vpack.c.b16 %v1823, %v1822
    %v1836 = vpack.c.b16 %v1825, %v1824
    %v1837 = vpack.c.b16 %v1827, %v1826
    %v1838 = vpack.c.b16 %v1829, %v1828
    %v1839 = vpack.c.b16 %v1831, %v1830
    %1848 = vmatprep.subr.bf16.mxu0 0
    %1849 = vmatpush1.bf16.msra.mxu0 %v1832
    %1850 = vmatprep.subr.bf16.mxu0 0
    %1851 = vmatpush1.bf16.msra.mxu0 %v1833
    %1852 = vmatprep.subr.bf16.mxu0 0
    %1853 = vmatpush1.bf16.msra.mxu0 %v1834
    %1854 = vmatprep.subr.bf16.mxu0 0
    %1855 = vmatpush1.bf16.msra.mxu0 %v1835
    %1856 = vmatprep.subr.bf16.mxu0 0
    %1857 = vmatpush1.bf16.msra.mxu0 %v1836
    %1858 = vmatprep.subr.bf16.mxu0 0
    %1859 = vmatpush1.bf16.msra.mxu0 %v1837
    %1860 = vmatprep.subr.bf16.mxu0 0
    %1861 = vmatpush1.bf16.msra.mxu0 %v1838
    %1862 = vmatprep.subr.bf16.mxu0 0
    %1863 = vmatpush1.bf16.msra.mxu0 %v1839
    %1864 = vmatprep.subr.bf16.mxu0 0
    %1865 = vmatpush1.bf16.msra.mxu0 0
    %1866 = vmatprep.subr.bf16.mxu0 0
    %1867 = vmatpush1.bf16.msra.mxu0 0
    %1868 = vmatprep.subr.bf16.mxu0 0
    %1869 = vmatpush1.bf16.msra.mxu0 0
    %1870 = vmatprep.subr.bf16.mxu0 0
    %1871 = vmatpush1.bf16.msra.mxu0 0
    %1872 = vmatprep.subr.bf16.mxu0 0
    %1873 = vmatpush1.bf16.msra.mxu0 0
    %1874 = vmatprep.subr.bf16.mxu0 0
    %1875 = vmatpush1.bf16.msra.mxu0 0
    %1876 = vmatprep.subr.bf16.mxu0 0
    %1877 = vmatpush1.bf16.msra.mxu0 0
    %1878 = vmatprep.subr.bf16.mxu0 0
    %1879 = vmatpush1.bf16.msra.mxu0 0
    %1880 = vmatprep.mubr.bf16.mxu0 0
    %1881 = vmatmul.mubr.bf16.gmra.mrb[0].mxu0 %v1798
    %v1882 = vpop.f32.mrb[0].mxu0
    %v1883 = vadd.f32 %v1790, %v1882
    %v1884 = vpop.f32.mrb[0].mxu0
    %v1885 = vpop.f32.mrb[0].mxu0
    %v1886 = vpop.f32.mrb[0].mxu0
    %1887 = vdwg.mxu0
    %v1888 = vmax.f32 %v1883, 0.0
    %v1889 = vpack.c.bf16 %v1888, %v1888
    %v1890 = vld [vmem:[%s12] sm:$0xf]
    %v1891 = vld [vmem:[%s13] sm:$0x1]
    %v1893 = vlaneseq
    %v1894 = vshrl.u32 %v1893, 7
    %v1895 = vsub.s32 0, %v1894
    %v1896 = vrot.slane %v1891, %v1895
    %vm1898 = vcmask 64512
    %v1900 = vsel %vm1898, %v1889, 0
    %vm1902 = vcmask 1043456
    %v1904 = vsel %vm1902, %v1890, 0
    %1906 = vmatprep.subr.bf16.mxu0 0
    %1907 = vmatpush1.bf16.msra.mxu0 %v1904
    %1908 = vmatprep.subr.bf16.mxu0 0
    %1909 = vmatpush1.bf16.msra.mxu0 0
    %1910 = vmatprep.subr.bf16.mxu0 0
    %1911 = vmatpush1.bf16.msra.mxu0 0
    %1912 = vmatprep.subr.bf16.mxu0 0
    %1913 = vmatpush1.bf16.msra.mxu0 0
    %1914 = vmatprep.subr.bf16.mxu0 0
    %1915 = vmatpush1.bf16.msra.mxu0 0
    %1916 = vmatprep.subr.bf16.mxu0 0
    %1917 = vmatpush1.bf16.msra.mxu0 0
    %1918 = vmatprep.subr.bf16.mxu0 0
    %1919 = vmatpush1.bf16.msra.mxu0 0
    %1920 = vmatprep.subr.bf16.mxu0 0
    %1921 = vmatpush1.bf16.msra.mxu0 0
    %1922 = vmatprep.subr.bf16.mxu0 0
    %1923 = vmatpush1.bf16.msra.mxu0 0
    %1924 = vmatprep.subr.bf16.mxu0 0
    %1925 = vmatpush1.bf16.msra.mxu0 0
    %1926 = vmatprep.subr.bf16.mxu0 0
    %1927 = vmatpush1.bf16.msra.mxu0 0
    %1928 = vmatprep.subr.bf16.mxu0 0
    %1929 = vmatpush1.bf16.msra.mxu0 0
    %1930 = vmatprep.subr.bf16.mxu0 0
    %1931 = vmatpush1.bf16.msra.mxu0 0
    %1932 = vmatprep.subr.bf16.mxu0 0
    %1933 = vmatpush1.bf16.msra.mxu0 0
    %1934 = vmatprep.subr.bf16.mxu0 0
    %1935 = vmatpush1.bf16.msra.mxu0 0
    %1936 = vmatprep.subr.bf16.mxu0 0
    %1937 = vmatpush1.bf16.msra.mxu0 0
    %1938 = vmatprep.mubr.bf16.mxu0 0
    %1939 = vmatmul.mubr.bf16.gmra.mrb[0].mxu0 %v1900
    %v1940 = vpop.f32.mrb[0].mxu0
    %v1941 = vadd.f32 %v1896, %v1940
    %v1942 = vpop.f32.mrb[0].mxu0
    %v1943 = vpop.f32.mrb[0].mxu0
    %v1944 = vpop.f32.mrb[0].mxu0
    %1945 = vdwg.mxu0
    %v1946 = vxor.u32 %v1941, 2147483648
    %v1947 = vmul.f32 %v1946, 1.442695
    %v1948 = vpow.pop %v1947
    %v1949 = vadd.f32 %v1948, 1.0
    %v1950 = vrcp.pop %v1949
    %v1951 = vmul.f32 1.0, %v1950
    %v1954 = vunpack.c.l.s4 1966171168
    %v1955 = vunpack.c.0.s8 %v1954
    %v1956 = vlaneseq
    %v1957 = vshrl.u32 %v1956, 7
    %v1958 = vsub.s32 %v1955, %v1957
    %v1959 = vrot.slane %v1951, %v1958
    %v1960 = vcombine.high %v1959, %v1959
    %v1962 = vunpack.c.l.s4 1966171168
    %v1963 = vunpack.c.0.s8 %v1962
    %v1964 = vlaneseq
    %v1965 = vshrl.u32 %v1964, 7
    %v1966 = vsub.s32 %v1963, %v1965
    %v1967 = vrot.slane %v1959, %v1966
    %v1969 = vunpack.c.l.s4 1966171168
    %v1970 = vunpack.c.0.s8 %v1969
    %v1971 = vlaneseq
    %v1972 = vshrl.u32 %v1971, 7
    %v1973 = vsub.s32 %v1970, %v1972
    %v1974 = vrot.slane %v1960, %v1973
    %v1975 = vlaneseq
    %v1976 = vshrl.u32 %v1975, 7
    %v1977 = vsub.s32 0, %v1976
    %v1978 = vrot.slane %v1967, %v1977
    %v1979 = vlaneseq
    %v1980 = vshrl.u32 %v1979, 7
    %v1981 = vsub.s32 0, %v1980
    %v1982 = vrot.slane %v1974, %v1981
    %v1985 = vmul.f32 %v1723, %v1978
    %v1986 = vmul.f32 %v1724, %v1978
    %v1987 = vmul.f32 %v1725, %v1978
    %v1988 = vmul.f32 %v1726, %v1978
    %v1989 = vmul.f32 %v1727, %v1978
    %v1990 = vmul.f32 %v1728, %v1978
    %v1991 = vmul.f32 %v1729, %v1978
    %v1992 = vmul.f32 %v1730, %v1978
    %v1993 = vmul.f32 %v1731, %v1982
    %v1994 = vmul.f32 %v1732, %v1982
    %v1995 = vmul.f32 %v1733, %v1982
    %v1996 = vmul.f32 %v1734, %v1982
    %v1997 = vmul.f32 %v1735, %v1982
    %v1998 = vmul.f32 %v1736, %v1982
    %v1999 = vmul.f32 %v1737, %v1982
    %v2000 = vmul.f32 %v1738, %v1982
    %v2001 = vadd.f32 %v1985, %v49
    %v2002 = vadd.f32 %v1986, %v50
    %v2003 = vadd.f32 %v1987, %v51
    %v2004 = vadd.f32 %v1988, %v52
    %v2005 = vadd.f32 %v1989, %v53
    %v2006 = vadd.f32 %v1990, %v54
    %v2007 = vadd.f32 %v1991, %v55
    %v2008 = vadd.f32 %v1992, %v56
    %v2009 = vadd.f32 %v1993, %v57
    %v2010 = vadd.f32 %v1994, %v58
    %v2011 = vadd.f32 %v1995, %v59
    %v2012 = vadd.f32 %v1996, %v60
    %v2013 = vadd.f32 %v1997, %v61
    %v2014 = vadd.f32 %v1998, %v62
    %v2015 = vadd.f32 %v1999, %v63
    %v2016 = vadd.f32 %v2000, %v64
    %v2017 = vmax.f32 %v2001, 0.0
    %v2018 = vmax.f32 %v2002, 0.0
    %v2019 = vmax.f32 %v2003, 0.0
    %v2020 = vmax.f32 %v2004, 0.0
    %v2021 = vmax.f32 %v2005, 0.0
    %v2022 = vmax.f32 %v2006, 0.0
    %v2023 = vmax.f32 %v2007, 0.0
    %v2024 = vmax.f32 %v2008, 0.0
    %v2025 = vmax.f32 %v2009, 0.0
    %v2026 = vmax.f32 %v2010, 0.0
    %v2027 = vmax.f32 %v2011, 0.0
    %v2028 = vmax.f32 %v2012, 0.0
    %v2029 = vmax.f32 %v2013, 0.0
    %v2030 = vmax.f32 %v2014, 0.0
    %v2031 = vmax.f32 %v2015, 0.0
    %v2032 = vmax.f32 %v2016, 0.0
    %2033 = vst [vmem:[#allocation3] sm:$0xff] %v2017
    %2034 = vst [vmem:[#allocation3 + $0x8] sm:$0xff] %v2018
    %2035 = vst [vmem:[#allocation3 + $0x10] sm:$0xff] %v2019
    %2036 = vst [vmem:[#allocation3 + $0x18] sm:$0xff] %v2020
    %2037 = vst [vmem:[#allocation3 + $0x20] sm:$0xff] %v2021
    %2038 = vst [vmem:[#allocation3 + $0x28] sm:$0xff] %v2022
    %2039 = vst [vmem:[#allocation3 + $0x30] sm:$0xff] %v2023
    %2040 = vst [vmem:[#allocation3 + $0x38] sm:$0xff] %v2024
    %2041 = vst [vmem:[#allocation3 + $0x40] sm:$0xff] %v2025
    %2042 = vst [vmem:[#allocation3 + $0x48] sm:$0xff] %v2026
    %2043 = vst [vmem:[#allocation3 + $0x50] sm:$0xff] %v2027
    %2044 = vst [vmem:[#allocation3 + $0x58] sm:$0xff] %v2028
    %2045 = vst [vmem:[#allocation3 + $0x60] sm:$0xff] %v2029
    %2046 = vst [vmem:[#allocation3 + $0x68] sm:$0xff] %v2030
    %2047 = vst [vmem:[#allocation3 + $0x70] sm:$0xff] %v2031
    %2048 = vst [vmem:[#allocation3 + $0x78] sm:$0xff] %v2032
    // Predicated region
    $region58: #{tpu_custom_call.1} parent=1 // pred_check
      _
    $region59: #{tpu_custom_call.1} parent=1 // pred_check_branch
      %2050 = sbr.rel (0) target = $region61
    $region60: #{tpu_custom_call.1} parent=1 // pred_region
      %s2052 = ssub.s32 2048, 2048
      %2053 = vsyncadd [#allocation4], %s2052
      %s2054 = sshll.u32 [#allocation3], 4
      %s2055 = int_to_ptr.vmem [resolvable:$true] %s2054
      %2060 = dma.vmem_to_hbm [thread:$0]  %s2055, 2048, %s14, [#allocation4], 128, 128, 8
    $region61: #{tpu_custom_call.1} parent=1 // pred_fallthru
      _
    // Predicated region
    $region62: #{tpu_custom_call.1} parent=1 // pred_check
      _
    $region63: #{tpu_custom_call.1} parent=1 // pred_check_branch
      %2062 = sbr.rel (0) target = $region65
    $region64: #{tpu_custom_call.1} parent=1 // pred_region
      %2063 = dma.done [#allocation4], 2048
    $region65: #{tpu_custom_call.1} parent=1 // pred_fallthru
      _
    %2064 = vsyncpa [#allocation4], 1

</llo_original>
